<compile_context>
chip_gen: v6e
topology: v6e:2x2x1
jax: 0.10.0
libtpu: 0.0.40
codegen_flags: <defaults>
</compile_context>

<pallas_src>
import functools
import math

import jax
import jax.numpy as jnp
from jax.experimental import pallas as pl
from jax.experimental.pallas import tpu as pltpu


OUT_PAD = 128  # lane-dense output slab width (q1 in lane 0, q2 in lane 1)


def _twin_critic_kernel(depth, *refs):
    # refs layout:
    #   state_ref, action_ref,
    #   ws, wa, b1,                       # fused layer 1 (weight split for state/action rows)
    #   (w_l, b_l) * (depth - 1),         # fused block-diagonal hidden layers 2..depth
    #   w_out, b_out,                     # fused, lane-padded output head
    #   out_ref                           # [bt, OUT_PAD]: q1 in lane 0, q2 in lane 1
    state_ref, action_ref = refs[0], refs[1]
    ws_ref, wa_ref, b1_ref = refs[2], refs[3], refs[4]
    hidden = refs[5:5 + 2 * (depth - 1)]
    w_out_ref = refs[5 + 2 * (depth - 1)]
    b_out_ref = refs[6 + 2 * (depth - 1)]
    out_ref = refs[7 + 2 * (depth - 1)]

    cdt = ws_ref.dtype  # MXU operand dtype (bf16 on v6e/v7x; f32 also supported)

    # Fused layer 1: both critics see the same (state, action) input, so the two
    # [tot, W] weights are concatenated along the out dim; the concat of the
    # input is folded into two accumulated matmuls.  Accumulate in f32.
    h = jnp.dot(state_ref[...].astype(cdt), ws_ref[...],
                preferred_element_type=jnp.float32)
    h = h + jnp.dot(action_ref[...].astype(cdt), wa_ref[...],
                    preferred_element_type=jnp.float32)
    h = jnp.maximum(h + b1_ref[...], 0.0)          # bias + ReLU in f32 (VPU)

    # Hidden layers 2..depth: block-diagonal fused [2W, 2W] weights.
    for l in range(depth - 1):
        w_ref, b_ref = hidden[2 * l], hidden[2 * l + 1]
        h = jnp.dot(h.astype(cdt), w_ref[...], preferred_element_type=jnp.float32)
        h = jnp.maximum(h + b_ref[...], 0.0)

    # Fused output head -> lane-dense slab (q1 lane 0, q2 lane 1, rest zeros).
    out = jnp.dot(h.astype(cdt), w_out_ref[...], preferred_element_type=jnp.float32)
    out_ref[...] = (out + b_out_ref[...]).astype(out_ref.dtype)


def _pick_batch_tile(B, D, A, params, requested=None,
                     vmem_budget_bytes=12 * 1024 * 1024):
    """Largest multiple-of-8 tile dividing B that fits a conservative VMEM
    budget and (when possible) leaves >= 2 grid steps (v7x megacore)."""
    if requested is not None:
        if B % requested:
            raise ValueError("batch_tile must divide the batch size")
        return requested
    cands = [t for t in range(8, min(B, 2048) + 1, 8) if B % t == 0]
    if not cands:
        return B  # tiny/odd batch: block == full dim is always legal

    p_bytes = sum(int(p.size) * p.dtype.itemsize for p in params)  # single-buffered
    two_w = params[2].shape[-1]  # fused hidden width = 2 * width

    def fits(bt):
        io = 2 * bt * (D + A) * 4          # double-buffered input tiles (f32)
        out = 2 * bt * OUT_PAD * 4         # double-buffered lane-dense output slab
        act = 4 * bt * two_w * 4           # live activation temporaries (generous)
        return p_bytes + io + out + act <= vmem_budget_bytes

    pref = [t for t in cands if B // t >= 2 and fits(t)]
    if pref:
        return max(pref)
    ok = [t for t in cands if fits(t)]
    return max(ok) if ok else min(cands)


def twin_critic_forward(state, action, params, *, depth, batch_tile=None):
    """params: fused kernel-order list [ws, wa, b1, (w_l, b_l)*(depth-1), w_out, b_out].
    Returns (q1, q2), each [B, 1]."""
    assert depth >= 1
    B, D = state.shape
    Ba, A = action.shape
    assert Ba == B
    assert len(params) == 2 * depth + 3

    bt = _pick_batch_tile(B, D, A, params, batch_tile)
    grid = (B // bt,)
    kernel = functools.partial(_twin_critic_kernel, depth)

    def run(param_pipeline_mode):
        param_kw = {} if param_pipeline_mode is None else dict(
            pipeline_mode=param_pipeline_mode)
        in_specs = [
            pl.BlockSpec((bt, D), lambda i: (i, 0)),
            pl.BlockSpec((bt, A), lambda i: (i, 0)),
        ]
        for p in params:
            # Constant index map: same block every grid step.
            in_specs.append(pl.BlockSpec(p.shape, lambda i: (0, 0), **param_kw))
        return pl.pallas_call(
            kernel,
            out_shape=jax.ShapeDtypeStruct((B, OUT_PAD), jnp.float32),
            grid=grid,
            in_specs=in_specs,
            out_specs=pl.BlockSpec((bt, OUT_PAD), lambda i: (i, 0)),
            compiler_params=pltpu.CompilerParams(
                dimension_semantics=("parallel",)),
        )(state, action, *params)

    try:
        # Single-buffer the (grid-invariant) parameters: halves weight VMEM.
        slab = run(pl.Buffered(1))
    except Exception:
        # Fallback for jax versions without single-buffer pipeline_mode support.
        slab = run(None)

    q1 = slab[:, 0:1]
    q2 = slab[:, 1:2]
    return q1, q2


# ---------------------------------------------------------------------------
# Parameter construction (PyTorch nn.Linear-style init) + fusion packing
# ---------------------------------------------------------------------------

def _init_linear(key, fan_in, fan_out):
    """U(-1/sqrt(fan_in), 1/sqrt(fan_in)), weight stored pre-transposed [in, out]."""
    kw, kb = jax.random.split(key)
    bound = 1.0 / math.sqrt(fan_in)
    w = jax.random.uniform(kw, (fan_in, fan_out), jnp.float32, -bound, bound)
    b = jax.random.uniform(kb, (fan_out,), jnp.float32, -bound, bound)
    return w, b


def make_twin_critic_raw_params(key, input_dim, n_actions, depth, width):
    """Two independent critic MLPs: list of 2 critics, each a list of (w, b)."""
    tot = input_dim + n_actions
    widths = [tot] + [width] * depth + [1]
    keys = jax.random.split(key, 2 * (depth + 1))
    ki = 0
    critics = []
    for _ in range(2):
        layers = []
        for l in range(depth + 1):
            w, b = _init_linear(keys[ki], widths[l], widths[l + 1])
            ki += 1
            layers.append((w, b))
        critics.append(layers)
    return critics


def fuse_twin_critic_params(critics, input_dim, n_actions, depth, width,
                            compute_dtype=jnp.bfloat16, out_pad=OUT_PAD):
    """Pack the two critics into fused kernel-order params.
    Weights are cast to compute_dtype (MXU operands); biases stay f32."""
    c1, c2 = critics
    W = width
    # Layer 1: concatenate along out dim; split rows into state / action parts.
    w1 = jnp.concatenate([c1[0][0], c2[0][0]], axis=1)          # [tot, 2W]
    b1 = jnp.concatenate([c1[0][1], c2[0][1]], axis=0)[None]    # [1, 2W]
    ws, wa = w1[:input_dim], w1[input_dim:]
    params = [ws.astype(compute_dtype), wa.astype(compute_dtype), b1]
    # Hidden layers 2..depth: block-diagonal.
    for l in range(1, depth):
        (wl1, bl1), (wl2, bl2) = c1[l], c2[l]
        wl = jnp.zeros((2 * W, 2 * W), jnp.float32)
        wl = wl.at[:W, :W].set(wl1).at[W:, W:].set(wl2)
        bl = jnp.concatenate([bl1, bl2], axis=0)[None]
        params += [wl.astype(compute_dtype), bl]
    # Output head: lane-dense padded slab (q1 -> lane 0, q2 -> lane 1).
    (wo1, bo1), (wo2, bo2) = c1[depth], c2[depth]
    w_out = jnp.zeros((2 * W, out_pad), jnp.float32)
    w_out = w_out.at[:W, 0:1].set(wo1).at[W:, 1:2].set(wo2)
    b_out = jnp.zeros((1, out_pad), jnp.float32)
    b_out = b_out.at[0, 0].set(bo1[0]).at[0, 1].set(bo2[0])
    params += [w_out.astype(compute_dtype), b_out]
    return params


def twin_critic_reference(state, action, critics):
    """Plain-JAX f32 reference with the exact TwinCriticMLP structure."""
    x = jnp.concatenate([state, action], axis=1)
    qs = []
    for layers in critics:
        h = x
        for w, b in layers[:-1]:
            h = jnp.maximum(h @ w + b, 0.0)
        w, b = layers[-1]
        qs.append(h @ w + b)
    return qs[0], qs[1]


# TODO(synk): save_checkpoint / load_checkpoint (file I/O) and FactNoisyLinear
# (nsy=True path) are host-side / unused-by-default concerns, not kernel ops.

if __name__ == "__main__":
    # Small shapes consistent with the module: vector state, continuous action.
    B = 16
    INPUT_DIM = 8
    N_ACTIONS = 4
    DEPTH = 2
    WIDTH = 32

    key = jax.random.PRNGKey(0)
    ks, ka, kp = jax.random.split(key, 3)
    state = jax.random.normal(ks, (B, INPUT_DIM), dtype=jnp.float32)
    action = jax.random.normal(ka, (B, N_ACTIONS), dtype=jnp.float32)

    critics = make_twin_critic_raw_params(kp, INPUT_DIM, N_ACTIONS, DEPTH, WIDTH)
    params = fuse_twin_critic_params(
        critics, INPUT_DIM, N_ACTIONS, DEPTH, WIDTH, compute_dtype=jnp.bfloat16)

    q1, q2 = twin_critic_forward(state, action, params, depth=DEPTH)
    jax.block_until_ready((q1, q2))

    # Validate the fused bf16-MXU kernel against the unfused f32 reference.
    r1, r2 = twin_critic_reference(state, action, critics)
    assert q1.shape == (B, 1) and q2.shape == (B, 1)
    assert bool(jnp.all(jnp.isfinite(q1))) and bool(jnp.all(jnp.isfinite(q2)))
    assert jnp.allclose(q1, r1, atol=5e-2, rtol=5e-2)
    assert jnp.allclose(q2, r2, atol=5e-2, rtol=5e-2)

    print("KERNEL_OK")
</pallas_src>

<mosaic_0001>
module attributes {stable_mosaic.version = 11 : i64} {
  func.func @_twin_critic_kernel(%arg0: i32, %arg1: memref<8x8xf32, #tpu.memory_space<vmem>>, %arg2: memref<8x4xf32, #tpu.memory_space<vmem>>, %arg3: memref<8x64xbf16, #tpu.memory_space<vmem>>, %arg4: memref<4x64xbf16, #tpu.memory_space<vmem>>, %arg5: memref<1x64xf32, #tpu.memory_space<vmem>>, %arg6: memref<64x64xbf16, #tpu.memory_space<vmem>>, %arg7: memref<1x64xf32, #tpu.memory_space<vmem>>, %arg8: memref<64x128xbf16, #tpu.memory_space<vmem>>, %arg9: memref<1x128xf32, #tpu.memory_space<vmem>>, %arg10: memref<8x128xf32, #tpu.memory_space<vmem>>) attributes {dimension_semantics = [#tpu.dimension_semantics<parallel>], iteration_bounds = array<i64: 2>, scalar_prefetch = 0 : i64, scratch_operands = 0 : i64, tpu.core_type = #tpu.core_type<tc>, window_params = [{transform_indices = @transform_0, window_bounds = array<i64: 8, 8>}, {transform_indices = @transform_1, window_bounds = array<i64: 8, 4>}, {pipeline_mode = #tpu.pipeline_mode<synchronous>, transform_indices = @transform_2, window_bounds = array<i64: 8, 64>}, {pipeline_mode = #tpu.pipeline_mode<synchronous>, transform_indices = @transform_3, window_bounds = array<i64: 4, 64>}, {pipeline_mode = #tpu.pipeline_mode<synchronous>, transform_indices = @transform_4, window_bounds = array<i64: 1, 64>}, {pipeline_mode = #tpu.pipeline_mode<synchronous>, transform_indices = @transform_5, window_bounds = array<i64: 64, 64>}, {pipeline_mode = #tpu.pipeline_mode<synchronous>, transform_indices = @transform_6, window_bounds = array<i64: 1, 64>}, {pipeline_mode = #tpu.pipeline_mode<synchronous>, transform_indices = @transform_7, window_bounds = array<i64: 64, 128>}, {pipeline_mode = #tpu.pipeline_mode<synchronous>, transform_indices = @transform_8, window_bounds = array<i64: 1, 128>}, {transform_indices = @transform_9, window_bounds = array<i64: 8, 128>}]} {
    %c0 = arith.constant 0 : index
    %c0_0 = arith.constant 0 : index
    %0 = vector.load %arg1[%c0, %c0_0] : memref<8x8xf32, #tpu.memory_space<vmem>>, vector<8x8xf32>
    %1 = arith.truncf %0 : vector<8x8xf32> to vector<8x8xbf16>
    %c0_1 = arith.constant 0 : index
    %c0_2 = arith.constant 0 : index
    %2 = vector.load %arg3[%c0_1, %c0_2] : memref<8x64xbf16, #tpu.memory_space<vmem>>, vector<8x64xbf16>
    %cst = arith.constant dense<0.000000e+00> : vector<8x64xf32>
    %3 = tpu.matmul %1, %2, %cst {dimension_numbers = #tpu.dot_dimension_numbers<[1], [0], [0], [1], [0, 0, 1, 1], [], []>} : vector<8x8xbf16>, vector<8x64xbf16>, vector<8x64xf32> -> vector<8x64xf32>
    %c0_3 = arith.constant 0 : index
    %c0_4 = arith.constant 0 : index
    %4 = vector.load %arg2[%c0_3, %c0_4] : memref<8x4xf32, #tpu.memory_space<vmem>>, vector<8x4xf32>
    %5 = arith.truncf %4 : vector<8x4xf32> to vector<8x4xbf16>
    %c0_5 = arith.constant 0 : index
    %c0_6 = arith.constant 0 : index
    %6 = vector.load %arg4[%c0_5, %c0_6] : memref<4x64xbf16, #tpu.memory_space<vmem>>, vector<4x64xbf16>
    %cst_7 = arith.constant dense<0.000000e+00> : vector<8x64xf32>
    %7 = tpu.matmul %5, %6, %cst_7 {dimension_numbers = #tpu.dot_dimension_numbers<[1], [0], [0], [1], [0, 0, 1, 1], [], []>} : vector<8x4xbf16>, vector<4x64xbf16>, vector<8x64xf32> -> vector<8x64xf32>
    %8 = arith.addf %3, %7 : vector<8x64xf32>
    %c0_8 = arith.constant 0 : index
    %c0_9 = arith.constant 0 : index
    %9 = vector.load %arg5[%c0_8, %c0_9] : memref<1x64xf32, #tpu.memory_space<vmem>>, vector<1x64xf32>
    %10 = vector.broadcast %9 : vector<1x64xf32> to vector<8x64xf32>
    %11 = arith.addf %8, %10 : vector<8x64xf32>
    %cst_10 = arith.constant 0.000000e+00 : f32
    %12 = vector.broadcast %cst_10 : f32 to vector<8x64xf32>
    %13 = arith.maximumf %11, %12 : vector<8x64xf32>
    %14 = arith.truncf %13 : vector<8x64xf32> to vector<8x64xbf16>
    %c0_11 = arith.constant 0 : index
    %c0_12 = arith.constant 0 : index
    %15 = vector.load %arg6[%c0_11, %c0_12] : memref<64x64xbf16, #tpu.memory_space<vmem>>, vector<64x64xbf16>
    %cst_13 = arith.constant dense<0.000000e+00> : vector<8x64xf32>
    %16 = tpu.matmul %14, %15, %cst_13 {dimension_numbers = #tpu.dot_dimension_numbers<[1], [0], [0], [1], [0, 0, 1, 1], [], []>} : vector<8x64xbf16>, vector<64x64xbf16>, vector<8x64xf32> -> vector<8x64xf32>
    %c0_14 = arith.constant 0 : index
    %c0_15 = arith.constant 0 : index
    %17 = vector.load %arg7[%c0_14, %c0_15] : memref<1x64xf32, #tpu.memory_space<vmem>>, vector<1x64xf32>
    %18 = vector.broadcast %17 : vector<1x64xf32> to vector<8x64xf32>
    %19 = arith.addf %16, %18 : vector<8x64xf32>
    %cst_16 = arith.constant 0.000000e+00 : f32
    %20 = vector.broadcast %cst_16 : f32 to vector<8x64xf32>
    %21 = arith.maximumf %19, %20 : vector<8x64xf32>
    %22 = arith.truncf %21 : vector<8x64xf32> to vector<8x64xbf16>
    %c0_17 = arith.constant 0 : index
    %c0_18 = arith.constant 0 : index
    %23 = vector.load %arg8[%c0_17, %c0_18] : memref<64x128xbf16, #tpu.memory_space<vmem>>, vector<64x128xbf16>
    %cst_19 = arith.constant dense<0.000000e+00> : vector<8x128xf32>
    %24 = tpu.matmul %22, %23, %cst_19 {dimension_numbers = #tpu.dot_dimension_numbers<[1], [0], [0], [1], [0, 0, 1, 1], [], []>} : vector<8x64xbf16>, vector<64x128xbf16>, vector<8x128xf32> -> vector<8x128xf32>
    %c0_20 = arith.constant 0 : index
    %c0_21 = arith.constant 0 : index
    %25 = vector.load %arg9[%c0_20, %c0_21] : memref<1x128xf32, #tpu.memory_space<vmem>>, vector<1x128xf32>
    %26 = vector.broadcast %25 : vector<1x128xf32> to vector<8x128xf32>
    %27 = arith.addf %24, %26 : vector<8x128xf32>
    %c0_22 = arith.constant 0 : index
    %c0_23 = arith.constant 0 : index
    %28 = vector.load %arg10[%c0_22, %c0_23] : memref<8x128xf32, #tpu.memory_space<vmem>>, vector<8x128xf32>
    tpu.vector_store %arg10[%c0_22, %c0_23], %27 {strides = array<i32>} : memref<8x128xf32, #tpu.memory_space<vmem>>, vector<8x128xf32>,
    return
  }
  func.func @transform_0(%arg0: i32) -> (i32, i32) {
    %c0_i32 = arith.constant 0 : i32
    %c0_i32_0 = arith.constant 0 : i32
    return %arg0, %c0_i32 : i32, i32
  }
  func.func @transform_1(%arg0: i32) -> (i32, i32) {
    %c0_i32 = arith.constant 0 : i32
    %c0_i32_0 = arith.constant 0 : i32
    return %arg0, %c0_i32 : i32, i32
  }
  func.func @transform_2(%arg0: i32) -> (i32, i32) {
    %c0_i32 = arith.constant 0 : i32
    %c0_i32_0 = arith.constant 0 : i32
    %c0_i32_1 = arith.constant 0 : i32
    return %c0_i32, %c0_i32_0 : i32, i32
  }
  func.func @transform_3(%arg0: i32) -> (i32, i32) {
    %c0_i32 = arith.constant 0 : i32
    %c0_i32_0 = arith.constant 0 : i32
    %c0_i32_1 = arith.constant 0 : i32
    return %c0_i32, %c0_i32_0 : i32, i32
  }
  func.func @transform_4(%arg0: i32) -> (i32, i32) {
    %c0_i32 = arith.constant 0 : i32
    %c0_i32_0 = arith.constant 0 : i32
    %c0_i32_1 = arith.constant 0 : i32
    return %c0_i32, %c0_i32_0 : i32, i32
  }
  func.func @transform_5(%arg0: i32) -> (i32, i32) {
    %c0_i32 = arith.constant 0 : i32
    %c0_i32_0 = arith.constant 0 : i32
    %c0_i32_1 = arith.constant 0 : i32
    return %c0_i32, %c0_i32_0 : i32, i32
  }
  func.func @transform_6(%arg0: i32) -> (i32, i32) {
    %c0_i32 = arith.constant 0 : i32
    %c0_i32_0 = arith.constant 0 : i32
    %c0_i32_1 = arith.constant 0 : i32
    return %c0_i32, %c0_i32_0 : i32, i32
  }
  func.func @transform_7(%arg0: i32) -> (i32, i32) {
    %c0_i32 = arith.constant 0 : i32
    %c0_i32_0 = arith.constant 0 : i32
    %c0_i32_1 = arith.constant 0 : i32
    return %c0_i32, %c0_i32_0 : i32, i32
  }
  func.func @transform_8(%arg0: i32) -> (i32, i32) {
    %c0_i32 = arith.constant 0 : i32
    %c0_i32_0 = arith.constant 0 : i32
    %c0_i32_1 = arith.constant 0 : i32
    return %c0_i32, %c0_i32_0 : i32, i32
  }
  func.func @transform_9(%arg0: i32) -> (i32, i32) {
    %c0_i32 = arith.constant 0 : i32
    %c0_i32_0 = arith.constant 0 : i32
    return %arg0, %c0_i32 : i32, i32
  }
}

module attributes {stable_mosaic.version = 11 : i64} {
  func.func @_twin_critic_kernel(%arg0: i32, %arg1: memref<8x8xf32, #tpu.memory_space<vmem>>, %arg2: memref<8x4xf32, #tpu.memory_space<vmem>>, %arg3: memref<8x64xbf16, #tpu.memory_space<vmem>>, %arg4: memref<4x64xbf16, #tpu.memory_space<vmem>>, %arg5: memref<1x64xf32, #tpu.memory_space<vmem>>, %arg6: memref<64x64xbf16, #tpu.memory_space<vmem>>, %arg7: memref<1x64xf32, #tpu.memory_space<vmem>>, %arg8: memref<64x128xbf16, #tpu.memory_space<vmem>>, %arg9: memref<1x128xf32, #tpu.memory_space<vmem>>, %arg10: memref<8x128xf32, #tpu.memory_space<vmem>>) attributes {dimension_semantics = [#tpu.dimension_semantics<parallel>], iteration_bounds = array<i64: 2>, scalar_prefetch = 0 : i64, scratch_operands = 0 : i64, tpu.core_type = #tpu.core_type<tc>, window_params = [{transform_indices = @transform_0, window_bounds = array<i64: 8, 8>}, {transform_indices = @transform_1, window_bounds = array<i64: 8, 4>}, {pipeline_mode = #tpu.pipeline_mode<synchronous>, transform_indices = @transform_2, window_bounds = array<i64: 8, 64>}, {pipeline_mode = #tpu.pipeline_mode<synchronous>, transform_indices = @transform_3, window_bounds = array<i64: 4, 64>}, {pipeline_mode = #tpu.pipeline_mode<synchronous>, transform_indices = @transform_4, window_bounds = array<i64: 1, 64>}, {pipeline_mode = #tpu.pipeline_mode<synchronous>, transform_indices = @transform_5, window_bounds = array<i64: 64, 64>}, {pipeline_mode = #tpu.pipeline_mode<synchronous>, transform_indices = @transform_6, window_bounds = array<i64: 1, 64>}, {pipeline_mode = #tpu.pipeline_mode<synchronous>, transform_indices = @transform_7, window_bounds = array<i64: 64, 128>}, {pipeline_mode = #tpu.pipeline_mode<synchronous>, transform_indices = @transform_8, window_bounds = array<i64: 1, 128>}, {transform_indices = @transform_9, window_bounds = array<i64: 8, 128>}]} {
    %c0 = arith.constant 0 : index
    %c0_0 = arith.constant 0 : index
    %0 = vector.load %arg1[%c0, %c0_0] : memref<8x8xf32, #tpu.memory_space<vmem>>, vector<8x8xf32>
    %1 = arith.truncf %0 : vector<8x8xf32> to vector<8x8xbf16>
    %c0_1 = arith.constant 0 : index
    %c0_2 = arith.constant 0 : index
    %2 = vector.load %arg3[%c0_1, %c0_2] : memref<8x64xbf16, #tpu.memory_space<vmem>>, vector<8x64xbf16>
    %cst = arith.constant dense<0.000000e+00> : vector<8x64xf32>
    %3 = tpu.matmul %1, %2, %cst {dimension_numbers = #tpu.dot_dimension_numbers<[1], [0], [0], [1], [0, 0, 1, 1], [], []>} : vector<8x8xbf16>, vector<8x64xbf16>, vector<8x64xf32> -> vector<8x64xf32>
    %c0_3 = arith.constant 0 : index
    %c0_4 = arith.constant 0 : index
    %4 = vector.load %arg2[%c0_3, %c0_4] : memref<8x4xf32, #tpu.memory_space<vmem>>, vector<8x4xf32>
    %5 = arith.truncf %4 : vector<8x4xf32> to vector<8x4xbf16>
    %c0_5 = arith.constant 0 : index
    %c0_6 = arith.constant 0 : index
    %6 = vector.load %arg4[%c0_5, %c0_6] : memref<4x64xbf16, #tpu.memory_space<vmem>>, vector<4x64xbf16>
    %cst_7 = arith.constant dense<0.000000e+00> : vector<8x64xf32>
    %7 = tpu.matmul %5, %6, %cst_7 {dimension_numbers = #tpu.dot_dimension_numbers<[1], [0], [0], [1], [0, 0, 1, 1], [], []>} : vector<8x4xbf16>, vector<4x64xbf16>, vector<8x64xf32> -> vector<8x64xf32>
    %8 = arith.addf %3, %7 : vector<8x64xf32>
    %c0_8 = arith.constant 0 : index
    %c0_9 = arith.constant 0 : index
    %9 = vector.load %arg5[%c0_8, %c0_9] : memref<1x64xf32, #tpu.memory_space<vmem>>, vector<1x64xf32>
    %10 = vector.broadcast %9 : vector<1x64xf32> to vector<8x64xf32>
    %11 = arith.addf %8, %10 : vector<8x64xf32>
    %cst_10 = arith.constant 0.000000e+00 : f32
    %12 = vector.broadcast %cst_10 : f32 to vector<8x64xf32>
    %13 = arith.maximumf %11, %12 : vector<8x64xf32>
    %14 = arith.truncf %13 : vector<8x64xf32> to vector<8x64xbf16>
    %c0_11 = arith.constant 0 : index
    %c0_12 = arith.constant 0 : index
    %15 = vector.load %arg6[%c0_11, %c0_12] : memref<64x64xbf16, #tpu.memory_space<vmem>>, vector<64x64xbf16>
    %cst_13 = arith.constant dense<0.000000e+00> : vector<8x64xf32>
    %16 = tpu.matmul %14, %15, %cst_13 {dimension_numbers = #tpu.dot_dimension_numbers<[1], [0], [0], [1], [0, 0, 1, 1], [], []>} : vector<8x64xbf16>, vector<64x64xbf16>, vector<8x64xf32> -> vector<8x64xf32>
    %c0_14 = arith.constant 0 : index
    %c0_15 = arith.constant 0 : index
    %17 = vector.load %arg7[%c0_14, %c0_15] : memref<1x64xf32, #tpu.memory_space<vmem>>, vector<1x64xf32>
    %18 = vector.broadcast %17 : vector<1x64xf32> to vector<8x64xf32>
    %19 = arith.addf %16, %18 : vector<8x64xf32>
    %cst_16 = arith.constant 0.000000e+00 : f32
    %20 = vector.broadcast %cst_16 : f32 to vector<8x64xf32>
    %21 = arith.maximumf %19, %20 : vector<8x64xf32>
    %22 = arith.truncf %21 : vector<8x64xf32> to vector<8x64xbf16>
    %c0_17 = arith.constant 0 : index
    %c0_18 = arith.constant 0 : index
    %23 = vector.load %arg8[%c0_17, %c0_18] : memref<64x128xbf16, #tpu.memory_space<vmem>>, vector<64x128xbf16>
    %cst_19 = arith.constant dense<0.000000e+00> : vector<8x128xf32>
    %24 = tpu.matmul %22, %23, %cst_19 {dimension_numbers = #tpu.dot_dimension_numbers<[1], [0], [0], [1], [0, 0, 1, 1], [], []>} : vector<8x64xbf16>, vector<64x128xbf16>, vector<8x128xf32> -> vector<8x128xf32>
    %c0_20 = arith.constant 0 : index
    %c0_21 = arith.constant 0 : index
    %25 = vector.load %arg9[%c0_20, %c0_21] : memref<1x128xf32, #tpu.memory_space<vmem>>, vector<1x128xf32>
    %26 = vector.broadcast %25 : vector<1x128xf32> to vector<8x128xf32>
    %27 = arith.addf %24, %26 : vector<8x128xf32>
    %c0_22 = arith.constant 0 : index
    %c0_23 = arith.constant 0 : index
    %28 = vector.load %arg10[%c0_22, %c0_23] : memref<8x128xf32, #tpu.memory_space<vmem>>, vector<8x128xf32>
    tpu.vector_store %arg10[%c0_22, %c0_23], %27 {strides = array<i32>} : memref<8x128xf32, #tpu.memory_space<vmem>>, vector<8x128xf32>,
    return
  }
  func.func @transform_0(%arg0: i32) -> (i32, i32) {
    %c0_i32 = arith.constant 0 : i32
    %c0_i32_0 = arith.constant 0 : i32
    return %arg0, %c0_i32 : i32, i32
  }
  func.func @transform_1(%arg0: i32) -> (i32, i32) {
    %c0_i32 = arith.constant 0 : i32
    %c0_i32_0 = arith.constant 0 : i32
    return %arg0, %c0_i32 : i32, i32
  }
  func.func @transform_2(%arg0: i32) -> (i32, i32) {
    %c0_i32 = arith.constant 0 : i32
    %c0_i32_0 = arith.constant 0 : i32
    %c0_i32_1 = arith.constant 0 : i32
    return %c0_i32, %c0_i32_0 : i32, i32
  }
  func.func @transform_3(%arg0: i32) -> (i32, i32) {
    %c0_i32 = arith.constant 0 : i32
    %c0_i32_0 = arith.constant 0 : i32
    %c0_i32_1 = arith.constant 0 : i32
    return %c0_i32, %c0_i32_0 : i32, i32
  }
  func.func @transform_4(%arg0: i32) -> (i32, i32) {
    %c0_i32 = arith.constant 0 : i32
    %c0_i32_0 = arith.constant 0 : i32
    %c0_i32_1 = arith.constant 0 : i32
    return %c0_i32, %c0_i32_0 : i32, i32
  }
  func.func @transform_5(%arg0: i32) -> (i32, i32) {
    %c0_i32 = arith.constant 0 : i32
    %c0_i32_0 = arith.constant 0 : i32
    %c0_i32_1 = arith.constant 0 : i32
    return %c0_i32, %c0_i32_0 : i32, i32
  }
  func.func @transform_6(%arg0: i32) -> (i32, i32) {
    %c0_i32 = arith.constant 0 : i32
    %c0_i32_0 = arith.constant 0 : i32
    %c0_i32_1 = arith.constant 0 : i32
    return %c0_i32, %c0_i32_0 : i32, i32
  }
  func.func @transform_7(%arg0: i32) -> (i32, i32) {
    %c0_i32 = arith.constant 0 : i32
    %c0_i32_0 = arith.constant 0 : i32
    %c0_i32_1 = arith.constant 0 : i32
    return %c0_i32, %c0_i32_0 : i32, i32
  }
  func.func @transform_8(%arg0: i32) -> (i32, i32) {
    %c0_i32 = arith.constant 0 : i32
    %c0_i32_0 = arith.constant 0 : i32
    %c0_i32_1 = arith.constant 0 : i32
    return %c0_i32, %c0_i32_0 : i32, i32
  }
  func.func @transform_9(%arg0: i32) -> (i32, i32) {
    %c0_i32 = arith.constant 0 : i32
    %c0_i32_0 = arith.constant 0 : i32
    return %arg0, %c0_i32 : i32, i32
  }
}

</mosaic_0001>

<llo_original>
// kernel: tpu_custom_call.1
$region0: #{tpu_custom_call.1}
  #allocation0 [shape = 'u32[]', space=smem, size = 0x4, offset = 0x4, fixed_abs, tag = 'smem constant byte address 0x4 - core index']
  #allocation1 [shape = 'u32[144,128]{1,0:T(1,128)}', space=vmem, size = 0x12000, scoped, tag = 'internal scratch']
  %s0 = inlined_call_operand.vmem [shape: f32[16,8], index: 0, kind: input, shape index: {}]
  %s1 = inlined_call_operand.vmem [shape: f32[16,4], index: 1, kind: input, shape index: {}]
  %s2 = inlined_call_operand.vmem [shape: bf16[8,64], index: 2, kind: input, shape index: {}]
  %s3 = inlined_call_operand.vmem [shape: bf16[4,64], index: 3, kind: input, shape index: {}]
  %s4 = inlined_call_operand.vmem [shape: f32[1,64], index: 4, kind: input, shape index: {}]
  %s5 = inlined_call_operand.vmem [shape: bf16[64,64], index: 5, kind: input, shape index: {}]
  %s6 = inlined_call_operand.vmem [shape: f32[1,64], index: 6, kind: input, shape index: {}]
  %s7 = inlined_call_operand.hbm [shape: bf16[64,128], index: 7, kind: input, shape index: {}]
  %s8 = inlined_call_operand.vmem [shape: f32[1,128], index: 8, kind: input, shape index: {}]
  %s9 = inlined_call_operand.hbm [shape: f32[16,128], index: 9, kind: output, shape index: {}]
  %s10 = sld [smem:[#allocation0]]
  $region73: #{tpu_custom_call.1} parent=0
    _
  %s12 = ssub.s32 1, %s10
  %s13 = scalar_select 0, %s12, %s10
  $region1: #{tpu_custom_call.1} parent=0
    #allocation2 [shape = 'u8[16384]{0}', space=vmem, size = 0x4000, scoped, tag = 'input window, operand 7, single buffered']
    #allocation3 [shape = 's32[2]{0}', space=sflag, size = 0x8, scoped, tag = 'scoped memory for tpu_custom_call.1']
    #allocation4 [shape = 's32[2]{0}', space=sflag, size = 0x8, scoped, tag = 'scoped memory for tpu_custom_call.1']
    #allocation5 [shape = 'u8[8192]{0}', space=vmem, size = 0x2000, scoped, tag = 'output window, operand 0']
    %14 = vsyncpa [#allocation3], 0
    %15 = vsyncpa [#allocation4], 0
    %s16 = scalar_lea.sflag [#allocation4], 1
    %17 = vsyncpa %s16, 0
    loop: start=0, step=1, limit=4
    $region2: #{tpu_custom_call.1} parent=1 // loop_pre_header
      _
    $region3: #{tpu_custom_call.1} parent=1 // loop_header
      %s19 = sphi 0, %s23
      %p20 = scmp.ge.s32.totalorder %s19, 4
      %s29 = sphi 0, %s31
      %s32 = sphi 0, %s29
      %s33 = sphi 0, %s32
      %s49 = sphi 0, %s33
      %s55 = sphi 0, %s57
      %s58 = sphi 0, %s55
      %s59 = sphi 0, %s58
      %s75 = sphi 0, %s59
      %s79 = sphi 0, %s79
      %s81 = sphi 0, %s79
      %s82 = sphi 0, %s81
      %s96 = sphi 0, %s82
      %s100 = sphi 0, %s100
      %s102 = sphi 0, %s100
      %s103 = sphi 0, %s102
      %s117 = sphi 0, %s103
      %s121 = sphi 0, %s121
      %s123 = sphi 0, %s121
      %s124 = sphi 0, %s123
      %s138 = sphi 0, %s124
      %s142 = sphi 0, %s142
      %s144 = sphi 0, %s142
      %s145 = sphi 0, %s144
      %s159 = sphi 0, %s145
      %s163 = sphi 0, %s163
      %s165 = sphi 0, %s163
      %s166 = sphi 0, %s165
      %s180 = sphi 0, %s166
      %s184 = sphi 0, %s184
      %s186 = sphi 0, %s184
      %s187 = sphi 0, %s186
      %s201 = sphi 0, %s187
      %s205 = sphi 0, %s205
      %s207 = sphi 0, %s205
      %s208 = sphi 0, %s207
      %s222 = sphi 0, %s208
      %s228 = sphi 0, %s230
      %s231 = sphi 0, %s228
      %s232 = sphi 0, %s231
      %s248 = sphi 0, %s232
    $region4: #{tpu_custom_call.1} parent=1 // loop_header_branch
      %22 = sbr.rel (%p20) target = $region8
    $region5: #{tpu_custom_call.1} parent=1 // loop_body
      %s24 = ssub.s32 %s19, 1
      %s25 = ssub.s32 %s19, 2
      %s26 = sadd.s32 %s19, 1
      %s27 = ssub.s32 %s19, %s26
      %p28 = scmp.eq.s32.totalorder %s27, 0
      %s30 = sadd.s32 %s29, 1
      %s31 = scalar_select %p28, %s29, %s30
      %p34 = pneg %p28
      %p35 = scmp.eq.s32.totalorder %s19, 1
      %p36 = por %p34, %p35
      %p37 = scmp.ne.s32.totalorder %s29, %s32
      %p38 = scmp.eq.s32.totalorder %s19, 0
      %p39 = por %p37, %p38
      %p40 = scmp.ne.s32.totalorder %s29, %s32
      %p41 = scmp.eq.s32.totalorder %s24, 1
      %p42 = por %p40, %p41
      %p43 = scmp.ne.s32.totalorder %s32, %s33
      %p44 = scmp.eq.s32.totalorder %s24, 0
      %p45 = por %p43, %p44
      %p46 = scmp.ne.s32.totalorder %s32, %s33
      %p47 = scmp.eq.s32.totalorder %s25, 1
      %p48 = por %p46, %p47
      %p50 = scmp.ne.s32.totalorder %s33, %s49
      %p51 = scmp.eq.s32.totalorder %s25, 0
      %p52 = por %p50, %p51
      %s53 = ssub.s32 %s19, %s26
      %p54 = scmp.eq.s32.totalorder %s53, 0
      %s56 = sadd.s32 %s55, 1
      %s57 = scalar_select %p54, %s55, %s56
      %p60 = pneg %p54
      %p61 = scmp.eq.s32.totalorder %s19, 1
      %p62 = por %p60, %p61
      %p63 = scmp.ne.s32.totalorder %s55, %s58
      %p64 = scmp.eq.s32.totalorder %s19, 0
      %p65 = por %p63, %p64
      %p66 = scmp.ne.s32.totalorder %s55, %s58
      %p67 = scmp.eq.s32.totalorder %s24, 1
      %p68 = por %p66, %p67
      %p69 = scmp.ne.s32.totalorder %s58, %s59
      %p70 = scmp.eq.s32.totalorder %s24, 0
      %p71 = por %p69, %p70
      %p72 = scmp.ne.s32.totalorder %s58, %s59
      %p73 = scmp.eq.s32.totalorder %s25, 1
      %p74 = por %p72, %p73
      %p76 = scmp.ne.s32.totalorder %s59, %s75
      %p77 = scmp.eq.s32.totalorder %s25, 0
      %p78 = por %p76, %p77
      %s80 = sadd.s32 %s79, 1
      %p83 = scmp.eq.s32.totalorder %s19, 1
      %p84 = scmp.ne.s32.totalorder %s79, %s81
      %p85 = scmp.eq.s32.totalorder %s19, 0
      %p86 = por %p84, %p85
      %p87 = scmp.ne.s32.totalorder %s79, %s81
      %p88 = scmp.eq.s32.totalorder %s24, 1
      %p89 = por %p87, %p88
      %p90 = scmp.ne.s32.totalorder %s81, %s82
      %p91 = scmp.eq.s32.totalorder %s24, 0
      %p92 = por %p90, %p91
      %p93 = scmp.ne.s32.totalorder %s81, %s82
      %p94 = scmp.eq.s32.totalorder %s25, 1
      %p95 = por %p93, %p94
      %p97 = scmp.ne.s32.totalorder %s82, %s96
      %p98 = scmp.eq.s32.totalorder %s25, 0
      %p99 = por %p97, %p98
      %s101 = sadd.s32 %s100, 1
      %p104 = scmp.eq.s32.totalorder %s19, 1
      %p105 = scmp.ne.s32.totalorder %s100, %s102
      %p106 = scmp.eq.s32.totalorder %s19, 0
      %p107 = por %p105, %p106
      %p108 = scmp.ne.s32.totalorder %s100, %s102
      %p109 = scmp.eq.s32.totalorder %s24, 1
      %p110 = por %p108, %p109
      %p111 = scmp.ne.s32.totalorder %s102, %s103
      %p112 = scmp.eq.s32.totalorder %s24, 0
      %p113 = por %p111, %p112
      %p114 = scmp.ne.s32.totalorder %s102, %s103
      %p115 = scmp.eq.s32.totalorder %s25, 1
      %p116 = por %p114, %p115
      %p118 = scmp.ne.s32.totalorder %s103, %s117
      %p119 = scmp.eq.s32.totalorder %s25, 0
      %p120 = por %p118, %p119
      %s122 = sadd.s32 %s121, 1
      %p125 = scmp.eq.s32.totalorder %s19, 1
      %p126 = scmp.ne.s32.totalorder %s121, %s123
      %p127 = scmp.eq.s32.totalorder %s19, 0
      %p128 = por %p126, %p127
      %p129 = scmp.ne.s32.totalorder %s121, %s123
      %p130 = scmp.eq.s32.totalorder %s24, 1
      %p131 = por %p129, %p130
      %p132 = scmp.ne.s32.totalorder %s123, %s124
      %p133 = scmp.eq.s32.totalorder %s24, 0
      %p134 = por %p132, %p133
      %p135 = scmp.ne.s32.totalorder %s123, %s124
      %p136 = scmp.eq.s32.totalorder %s25, 1
      %p137 = por %p135, %p136
      %p139 = scmp.ne.s32.totalorder %s124, %s138
      %p140 = scmp.eq.s32.totalorder %s25, 0
      %p141 = por %p139, %p140
      %s143 = sadd.s32 %s142, 1
      %p146 = scmp.eq.s32.totalorder %s19, 1
      %p147 = scmp.ne.s32.totalorder %s142, %s144
      %p148 = scmp.eq.s32.totalorder %s19, 0
      %p149 = por %p147, %p148
      %p150 = scmp.ne.s32.totalorder %s142, %s144
      %p151 = scmp.eq.s32.totalorder %s24, 1
      %p152 = por %p150, %p151
      %p153 = scmp.ne.s32.totalorder %s144, %s145
      %p154 = scmp.eq.s32.totalorder %s24, 0
      %p155 = por %p153, %p154
      %p156 = scmp.ne.s32.totalorder %s144, %s145
      %p157 = scmp.eq.s32.totalorder %s25, 1
      %p158 = por %p156, %p157
      %p160 = scmp.ne.s32.totalorder %s145, %s159
      %p161 = scmp.eq.s32.totalorder %s25, 0
      %p162 = por %p160, %p161
      %s164 = sadd.s32 %s163, 1
      %p167 = scmp.eq.s32.totalorder %s19, 1
      %p168 = scmp.ne.s32.totalorder %s163, %s165
      %p169 = scmp.eq.s32.totalorder %s19, 0
      %p170 = por %p168, %p169
      %p171 = scmp.ne.s32.totalorder %s163, %s165
      %p172 = scmp.eq.s32.totalorder %s24, 1
      %p173 = por %p171, %p172
      %p174 = scmp.ne.s32.totalorder %s165, %s166
      %p175 = scmp.eq.s32.totalorder %s24, 0
      %p176 = por %p174, %p175
      %p177 = scmp.ne.s32.totalorder %s165, %s166
      %p178 = scmp.eq.s32.totalorder %s25, 1
      %p179 = por %p177, %p178
      %p181 = scmp.ne.s32.totalorder %s166, %s180
      %p182 = scmp.eq.s32.totalorder %s25, 0
      %p183 = por %p181, %p182
      %s185 = sadd.s32 %s184, 1
      %p188 = scmp.eq.s32.totalorder %s19, 1
      %p189 = scmp.ne.s32.totalorder %s184, %s186
      %p190 = scmp.eq.s32.totalorder %s19, 0
      %p191 = por %p189, %p190
      %p192 = scmp.ne.s32.totalorder %s184, %s186
      %p193 = scmp.eq.s32.totalorder %s24, 1
      %p194 = por %p192, %p193
      %p195 = scmp.ne.s32.totalorder %s186, %s187
      %p196 = scmp.eq.s32.totalorder %s24, 0
      %p197 = por %p195, %p196
      %p198 = scmp.ne.s32.totalorder %s186, %s187
      %p199 = scmp.eq.s32.totalorder %s25, 1
      %p200 = por %p198, %p199
      %p202 = scmp.ne.s32.totalorder %s187, %s201
      %p203 = scmp.eq.s32.totalorder %s25, 0
      %p204 = por %p202, %p203
      %s206 = sadd.s32 %s205, 1
      %p209 = scmp.eq.s32.totalorder %s19, 1
      %p210 = scmp.ne.s32.totalorder %s205, %s207
      %p211 = scmp.eq.s32.totalorder %s19, 0
      %p212 = por %p210, %p211
      %p213 = scmp.ne.s32.totalorder %s205, %s207
      %p214 = scmp.eq.s32.totalorder %s24, 1
      %p215 = por %p213, %p214
      %p216 = scmp.ne.s32.totalorder %s207, %s208
      %p217 = scmp.eq.s32.totalorder %s24, 0
      %p218 = por %p216, %p217
      %p219 = scmp.ne.s32.totalorder %s207, %s208
      %p220 = scmp.eq.s32.totalorder %s25, 1
      %p221 = por %p219, %p220
      %p223 = scmp.ne.s32.totalorder %s208, %s222
      %p224 = scmp.eq.s32.totalorder %s25, 0
      %p225 = por %p223, %p224
      %s226 = ssub.s32 %s19, %s26
      %p227 = scmp.eq.s32.totalorder %s226, 0
      %s229 = sadd.s32 %s228, 1
      %s230 = scalar_select %p227, %s228, %s229
      %p233 = pneg %p227
      %p234 = scmp.eq.s32.totalorder %s19, 1
      %p235 = por %p233, %p234
      %p236 = scmp.ne.s32.totalorder %s228, %s231
      %p237 = scmp.eq.s32.totalorder %s19, 0
      %p238 = por %p236, %p237
      %p239 = scmp.ne.s32.totalorder %s228, %s231
      %p240 = scmp.eq.s32.totalorder %s24, 1
      %p241 = por %p239, %p240
      %p242 = scmp.ne.s32.totalorder %s231, %s232
      %p243 = scmp.eq.s32.totalorder %s24, 0
      %p244 = por %p242, %p243
      %p245 = scmp.ne.s32.totalorder %s231, %s232
      %p246 = scmp.eq.s32.totalorder %s25, 1
      %p247 = por %p245, %p246
      %p249 = scmp.ne.s32.totalorder %s232, %s248
      %p250 = scmp.eq.s32.totalorder %s25, 0
      %p251 = por %p249, %p250
      %p252 = scmp.le.s32.totalorder 1, %s19
      %p253 = scmp.lt.s32.totalorder %s19, 3
      %p254 = pnand %p252, %p253
      %p255 = pneg %p254
      // Predicated region
      $region9: #{tpu_custom_call.1} parent=5 // pred_check
        _
      $region10: #{tpu_custom_call.1} parent=5 // pred_check_branch
        %257 = sbr.rel (%p254) target = $region12
      $region11: #{tpu_custom_call.1} parent=5 // pred_region
        %s258 = ssub.s32 %s19, 1
        // Predicated region
        $region13: #{tpu_custom_call.1} parent=11 // pred_check
          %p259 = pneg %p92
        $region14: #{tpu_custom_call.1} parent=11 // pred_check_branch
          %261 = sbr.rel (%p259) target = $region16
        $region15: #{tpu_custom_call.1} parent=11 // pred_region
          _
        $region16: #{tpu_custom_call.1} parent=11 // pred_fallthru
          _
        // Predicated region
        $region17: #{tpu_custom_call.1} parent=11 // pred_check
          %p262 = pneg %p113
        $region18: #{tpu_custom_call.1} parent=11 // pred_check_branch
          %264 = sbr.rel (%p262) target = $region20
        $region19: #{tpu_custom_call.1} parent=11 // pred_region
          _
        $region20: #{tpu_custom_call.1} parent=11 // pred_fallthru
          _
        // Predicated region
        $region21: #{tpu_custom_call.1} parent=11 // pred_check
          %p265 = pneg %p134
        $region22: #{tpu_custom_call.1} parent=11 // pred_check_branch
          %267 = sbr.rel (%p265) target = $region24
        $region23: #{tpu_custom_call.1} parent=11 // pred_region
          _
        $region24: #{tpu_custom_call.1} parent=11 // pred_fallthru
          _
        // Predicated region
        $region25: #{tpu_custom_call.1} parent=11 // pred_check
          %p268 = pneg %p155
        $region26: #{tpu_custom_call.1} parent=11 // pred_check_branch
          %270 = sbr.rel (%p268) target = $region28
        $region27: #{tpu_custom_call.1} parent=11 // pred_region
          _
        $region28: #{tpu_custom_call.1} parent=11 // pred_fallthru
          _
        // Predicated region
        $region29: #{tpu_custom_call.1} parent=11 // pred_check
          %p271 = pneg %p176
        $region30: #{tpu_custom_call.1} parent=11 // pred_check_branch
          %273 = sbr.rel (%p271) target = $region32
        $region31: #{tpu_custom_call.1} parent=11 // pred_region
          _
        $region32: #{tpu_custom_call.1} parent=11 // pred_fallthru
          _
        // Predicated region
        $region33: #{tpu_custom_call.1} parent=11 // pred_check
          %p274 = pneg %p197
        $region34: #{tpu_custom_call.1} parent=11 // pred_check_branch
          %276 = sbr.rel (%p274) target = $region36
        $region35: #{tpu_custom_call.1} parent=11 // pred_region
          %s278 = ssub.s32 512, 512
          %279 = vsyncadd [#allocation3], %s278
          %s280 = sshll.u32 [#allocation2], 4
          %s281 = int_to_ptr.vmem [resolvable:$true] %s280
          %286 = dma.hbm_to_vmem [thread:$0]  %s7, 512, %s281, [#allocation3], 64, 64, 4
        $region36: #{tpu_custom_call.1} parent=11 // pred_fallthru
          _
        // Predicated region
        $region37: #{tpu_custom_call.1} parent=11 // pred_check
          %p287 = pneg %p218
        $region38: #{tpu_custom_call.1} parent=11 // pred_check_branch
          %289 = sbr.rel (%p287) target = $region40
        $region39: #{tpu_custom_call.1} parent=11 // pred_region
          _
        $region40: #{tpu_custom_call.1} parent=11 // pred_fallthru
          _
      $region12: #{tpu_custom_call.1} parent=5 // pred_fallthru
        _
      %p290 = scmp.lt.s32.totalorder %s19, 2
      // Predicated region
      $region41: #{tpu_custom_call.1} parent=5 // pred_check
        %p291 = pneg %p290
      $region42: #{tpu_custom_call.1} parent=5 // pred_check_branch
        %293 = sbr.rel (%p291) target = $region44
      $region43: #{tpu_custom_call.1} parent=5 // pred_region
        // Predicated region
        $region45: #{tpu_custom_call.1} parent=43 // pred_check
          %p294 = pneg %p39
        $region46: #{tpu_custom_call.1} parent=43 // pred_check_branch
          %296 = sbr.rel (%p294) target = $region48
        $region47: #{tpu_custom_call.1} parent=43 // pred_region
          %p297 = scmp.lt.s32.totalorder %s19, 1
          %s298 = scalar_select %p297, %s19, 1
          %s299 = smul.addr %s298, 8
          %s300 = scalar_lea.vmem %s0, %s299
        $region48: #{tpu_custom_call.1} parent=43 // pred_fallthru
          _
        // Predicated region
        $region49: #{tpu_custom_call.1} parent=43 // pred_check
          %p301 = pneg %p65
        $region50: #{tpu_custom_call.1} parent=43 // pred_check_branch
          %303 = sbr.rel (%p301) target = $region52
        $region51: #{tpu_custom_call.1} parent=43 // pred_region
          %p304 = scmp.lt.s32.totalorder %s19, 1
          %s305 = scalar_select %p304, %s19, 1
          %s306 = smul.addr %s305, 8
          %s307 = scalar_lea.vmem %s1, %s306
        $region52: #{tpu_custom_call.1} parent=43 // pred_fallthru
          _
      $region44: #{tpu_custom_call.1} parent=5 // pred_fallthru
        _
      %p308 = scmp.le.s32.totalorder 1, %s19
      %p309 = scmp.lt.s32.totalorder %s19, 3
      %p310 = pnand %p308, %p309
      %p311 = pneg %p310
      // Predicated region
      $region53: #{tpu_custom_call.1} parent=5 // pred_check
        _
      $region54: #{tpu_custom_call.1} parent=5 // pred_check_branch
        %313 = sbr.rel (%p310) target = $region56
      $region55: #{tpu_custom_call.1} parent=5 // pred_region
        %s314 = ssub.s32 %s19, 1
        // Predicated region
        $region57: #{tpu_custom_call.1} parent=55 // pred_check
          %p315 = pneg %p197
        $region58: #{tpu_custom_call.1} parent=55 // pred_check_branch
          %317 = sbr.rel (%p315) target = $region60
        $region59: #{tpu_custom_call.1} parent=55 // pred_region
          %318 = dma.done [#allocation3], 512
        $region60: #{tpu_custom_call.1} parent=55 // pred_fallthru
          _
        %p319 = scmp.lt.s32.totalorder %s24, 1
        %s320 = scalar_select %p319, %s24, 1
        %s321 = smul.addr %s320, 8
        %s322 = scalar_lea.vmem %s0, %s321
        %p323 = pneg %p45
        %p324 = pneg %p42
        %p325 = scmp.lt.s32.totalorder %s24, 1
        %s326 = scalar_select %p325, %s24, 1
        %s327 = smul.addr %s326, 8
        %s328 = scalar_lea.vmem %s1, %s327
        %p329 = pneg %p71
        %p330 = pneg %p68
        %p331 = pneg %p92
        %p332 = pneg %p89
        %p333 = pneg %p113
        %p334 = pneg %p110
        %p335 = pneg %p134
        %p336 = pneg %p131
        %p337 = pneg %p155
        %p338 = pneg %p152
        %p339 = pneg %p176
        %p340 = pneg %p173
        %p341 = pneg %p197
        %p342 = pneg %p194
        %p343 = pneg %p218
        %p344 = pneg %p215
        %p345 = pneg %p244
        %p346 = pneg %p241
        %s347 = sand.u32 %s231, 1
        %s348 = scalar_lea.sflag [#allocation4], %s347
        %s349 = sand.u32 %s231, 1
        %s350 = smul.addr %s349, 8
        %s351 = scalar_lea.vmem [#allocation5], %s350
        %p352 = scmp.lt.s32.totalorder %s24, 1
        %s353 = scalar_select %p352, %s24, 1
        %s354 = smul.addr %s353, 8
        %s355 = scalar_lea.vmem %s0, %s354
        %p356 = scmp.lt.s32.totalorder %s24, 1
        %s357 = scalar_select %p356, %s24, 1
        %s358 = smul.addr %s357, 8
        %s359 = scalar_lea.vmem %s1, %s358
        %v361 = vld [vmem:[%s355] sm:$0xff]
        %v362 = vpack.c.bf16 %v361, %v361
        %v363 = vld [vmem:[%s2] sm:$0xf]
        %v364 = vld [vmem:[%s359] sm:$0xff]
        %v365 = vpack.c.bf16 %v364, %v364
        %v366 = vld [vmem:[%s3] sm:$0x3]
        %vm367 = vcmask 31744
        %v369 = vsel %vm367, %v365, 0
        %vm371 = vcmask 1041408
        %v373 = vsel %vm371, %v366, 0
        %375 = vmatprep.subr.bf16.mxu0 0
        %376 = vmatpush1.bf16.msra.mxu0 0
        %377 = vmatprep.subr.bf16.mxu0 0
        %378 = vmatpush1.bf16.msra.mxu0 0
        %379 = vmatprep.subr.bf16.mxu0 0
        %380 = vmatpush1.bf16.msra.mxu0 0
        %381 = vmatprep.subr.bf16.mxu0 0
        %382 = vmatpush1.bf16.msra.mxu0 0
        %383 = vmatprep.subr.bf16.mxu0 0
        %384 = vmatpush1.bf16.msra.mxu0 0
        %385 = vmatprep.subr.bf16.mxu0 0
        %386 = vmatpush1.bf16.msra.mxu0 0
        %387 = vmatprep.subr.bf16.mxu0 0
        %388 = vmatpush1.bf16.msra.mxu0 0
        %389 = vmatprep.subr.bf16.mxu0 0
        %390 = vmatpush1.bf16.msra.mxu0 %v373
        %391 = vmatprep.subr.bf16.mxu0 0
        %392 = vmatpush2.bf16.msra.mxu0 0
        %393 = vmatprep.subr.bf16.mxu0 0
        %394 = vmatpush2.bf16.msra.mxu0 0
        %395 = vmatprep.subr.bf16.mxu0 0
        %396 = vmatpush2.bf16.msra.mxu0 0
        %397 = vmatprep.subr.bf16.mxu0 0
        %398 = vmatpush2.bf16.msra.mxu0 0
        %399 = vmatprep.subr.bf16.mxu0 0
        %400 = vmatpush2.bf16.msra.mxu0 0
        %401 = vmatprep.subr.bf16.mxu0 0
        %402 = vmatpush2.bf16.msra.mxu0 0
        %403 = vmatprep.subr.bf16.mxu0 0
        %404 = vmatpush2.bf16.msra.mxu0 0
        %405 = vmatprep.subr.bf16.mxu0 0
        %406 = vmatpush2.bf16.msra.mxu0 0
        %407 = vmatprep.mubr.bf16.mxu0 0
        %408 = vmatmul.mubr.bf16.gmra.mxu0 %v369
        %v409 = vpop.f32.mrf.mxu0
        %v410 = vadd.f32 0.0, %v409
        %v411 = vpop.f32.mrf.mxu0
        %v412 = vpop.f32.mrf.mxu0
        %v413 = vpop.f32.mrf.mxu0
        %414 = vdwg.mxu0
        %vm415 = vcmask 64512
        %v417 = vsel %vm415, %v362, 0
        %vm419 = vcmask 1043456
        %v421 = vsel %vm419, %v363, 0
        %423 = vmatprep.subr.bf16.mxu0 0
        %424 = vmatpush1.bf16.msra.mxu0 0
        %425 = vmatprep.subr.bf16.mxu0 0
        %426 = vmatpush1.bf16.msra.mxu0 0
        %427 = vmatprep.subr.bf16.mxu0 0
        %428 = vmatpush1.bf16.msra.mxu0 0
        %429 = vmatprep.subr.bf16.mxu0 0
        %430 = vmatpush1.bf16.msra.mxu0 0
        %431 = vmatprep.subr.bf16.mxu0 0
        %432 = vmatpush1.bf16.msra.mxu0 0
        %433 = vmatprep.subr.bf16.mxu0 0
        %434 = vmatpush1.bf16.msra.mxu0 0
        %435 = vmatprep.subr.bf16.mxu0 0
        %436 = vmatpush1.bf16.msra.mxu0 0
        %437 = vmatprep.subr.bf16.mxu0 0
        %438 = vmatpush1.bf16.msra.mxu0 %v421
        %439 = vmatprep.subr.bf16.mxu0 0
        %440 = vmatpush2.bf16.msra.mxu0 0
        %441 = vmatprep.subr.bf16.mxu0 0
        %442 = vmatpush2.bf16.msra.mxu0 0
        %443 = vmatprep.subr.bf16.mxu0 0
        %444 = vmatpush2.bf16.msra.mxu0 0
        %445 = vmatprep.subr.bf16.mxu0 0
        %446 = vmatpush2.bf16.msra.mxu0 0
        %447 = vmatprep.subr.bf16.mxu0 0
        %448 = vmatpush2.bf16.msra.mxu0 0
        %449 = vmatprep.subr.bf16.mxu0 0
        %450 = vmatpush2.bf16.msra.mxu0 0
        %451 = vmatprep.subr.bf16.mxu0 0
        %452 = vmatpush2.bf16.msra.mxu0 0
        %453 = vmatprep.subr.bf16.mxu0 0
        %454 = vmatpush2.bf16.msra.mxu0 0
        %455 = vmatprep.mubr.bf16.mxu0 0
        %456 = vmatmul.mubr.bf16.gmra.mxu0 %v417
        %v457 = vpop.f32.mrf.mxu0
        %v458 = vadd.f32 %v410, %v457
        %v459 = vpop.f32.mrf.mxu0
        %v460 = vpop.f32.mrf.mxu0
        %v461 = vpop.f32.mrf.mxu0
        %462 = vdwg.mxu0
        %v463 = vld [vmem:[%s4] sm:$0x1]
        %v465 = vlaneseq
        %v466 = vshrl.u32 %v465, 7
        %v467 = vsub.s32 0, %v466
        %v468 = vrot.slane %v463, %v467
        %v470 = vadd.f32 %v458, %v468
        %v471 = vmax.f32 %v470, 0.0
        %v472 = vpack.c.bf16 %v471, %v471
        %v473 = vld [vmem:[%s5] sm:$0xf]
        %v474 = vld [vmem:[%s5 + $0x4] sm:$0xf]
        %v475 = vld [vmem:[%s5 + $0x8] sm:$0xf]
        %v476 = vld [vmem:[%s5 + $0xc] sm:$0xf]
        %v477 = vld [vmem:[%s5 + $0x10] sm:$0xf]
        %v478 = vld [vmem:[%s5 + $0x14] sm:$0xf]
        %v479 = vld [vmem:[%s5 + $0x18] sm:$0xf]
        %v480 = vld [vmem:[%s5 + $0x1c] sm:$0xf]
        %v481 = vld [vmem:[%s6] sm:$0x1]
        %v483 = vlaneseq
        %v484 = vshrl.u32 %v483, 7
        %v485 = vsub.s32 0, %v484
        %v486 = vrot.slane %v481, %v485
        %v496 = vunpack.c.l.b16 %v473
        %v497 = vunpack.c.l.b16 %v474
        %v498 = vunpack.c.l.b16 %v475
        %v499 = vunpack.c.l.b16 %v476
        %v500 = vunpack.c.l.b16 %v477
        %v501 = vunpack.c.l.b16 %v478
        %v502 = vunpack.c.l.b16 %v479
        %v503 = vunpack.c.l.b16 %v480
        %v504 = vpack.c.b16 %v497, %v496
        %v505 = vpack.c.b16 %v499, %v498
        %v506 = vpack.c.b16 %v501, %v500
        %v507 = vpack.c.b16 %v503, %v502
        %vm512 = vcmask 523264
        %v514 = vsel %vm512, %v472, 0
        %516 = vmatprep.subr.bf16.mxu0 0
        %517 = vmatpush1.bf16.msra.mxu0 0
        %518 = vmatprep.subr.bf16.mxu0 0
        %519 = vmatpush1.bf16.msra.mxu0 0
        %520 = vmatprep.subr.bf16.mxu0 0
        %521 = vmatpush1.bf16.msra.mxu0 0
        %522 = vmatprep.subr.bf16.mxu0 0
        %523 = vmatpush1.bf16.msra.mxu0 0
        %524 = vmatprep.subr.bf16.mxu0 0
        %525 = vmatpush1.bf16.msra.mxu0 %v507
        %526 = vmatprep.subr.bf16.mxu0 0
        %527 = vmatpush1.bf16.msra.mxu0 %v506
        %528 = vmatprep.subr.bf16.mxu0 0
        %529 = vmatpush1.bf16.msra.mxu0 %v505
        %530 = vmatprep.subr.bf16.mxu0 0
        %531 = vmatpush1.bf16.msra.mxu0 %v504
        %532 = vmatprep.subr.bf16.mxu0 0
        %533 = vmatpush2.bf16.msra.mxu0 0
        %534 = vmatprep.subr.bf16.mxu0 0
        %535 = vmatpush2.bf16.msra.mxu0 0
        %536 = vmatprep.subr.bf16.mxu0 0
        %537 = vmatpush2.bf16.msra.mxu0 0
        %538 = vmatprep.subr.bf16.mxu0 0
        %539 = vmatpush2.bf16.msra.mxu0 0
        %540 = vmatprep.subr.bf16.mxu0 0
        %541 = vmatpush2.bf16.msra.mxu0 0
        %542 = vmatprep.subr.bf16.mxu0 0
        %543 = vmatpush2.bf16.msra.mxu0 0
        %544 = vmatprep.subr.bf16.mxu0 0
        %545 = vmatpush2.bf16.msra.mxu0 0
        %546 = vmatprep.subr.bf16.mxu0 0
        %547 = vmatpush2.bf16.msra.mxu0 0
        %548 = vmatprep.mubr.bf16.mxu0 0
        %549 = vmatmul.mubr.bf16.gmra.mxu0 %v514
        %v550 = vpop.f32.mrf.mxu0
        %v551 = vadd.f32 %v486, %v550
        %v552 = vpop.f32.mrf.mxu0
        %v553 = vpop.f32.mrf.mxu0
        %v554 = vpop.f32.mrf.mxu0
        %555 = vdwg.mxu0
        %v556 = vmax.f32 %v551, 0.0
        %v557 = vpack.c.bf16 %v556, %v556
        %v558 = vld [vmem:[#allocation2] sm:$0xf]
        %v559 = vld [vmem:[#allocation2 + $0x4] sm:$0xf]
        %v560 = vld [vmem:[#allocation2 + $0x8] sm:$0xf]
        %v561 = vld [vmem:[#allocation2 + $0xc] sm:$0xf]
        %v562 = vld [vmem:[#allocation2 + $0x10] sm:$0xf]
        %v563 = vld [vmem:[#allocation2 + $0x14] sm:$0xf]
        %v564 = vld [vmem:[#allocation2 + $0x18] sm:$0xf]
        %v565 = vld [vmem:[#allocation2 + $0x1c] sm:$0xf]
        %v566 = vld [vmem:[%s8] sm:$0x1]
        %v568 = vlaneseq
        %v569 = vshrl.u32 %v568, 7
        %v570 = vsub.s32 0, %v569
        %v571 = vrot.slane %v566, %v570
        %v581 = vunpack.c.l.b16 %v558
        %v582 = vunpack.c.l.b16 %v559
        %v583 = vunpack.c.l.b16 %v560
        %v584 = vunpack.c.l.b16 %v561
        %v585 = vunpack.c.l.b16 %v562
        %v586 = vunpack.c.l.b16 %v563
        %v587 = vunpack.c.l.b16 %v564
        %v588 = vunpack.c.l.b16 %v565
        %v589 = vpack.c.b16 %v582, %v581
        %v590 = vpack.c.b16 %v584, %v583
        %v591 = vpack.c.b16 %v586, %v585
        %v592 = vpack.c.b16 %v588, %v587
        %v598 = vsel %vm512, %v557, 0
        %600 = vmatprep.subr.bf16.mxu0 0
        %601 = vmatpush1.bf16.msra.mxu0 0
        %602 = vmatprep.subr.bf16.mxu0 0
        %603 = vmatpush1.bf16.msra.mxu0 0
        %604 = vmatprep.subr.bf16.mxu0 0
        %605 = vmatpush1.bf16.msra.mxu0 0
        %606 = vmatprep.subr.bf16.mxu0 0
        %607 = vmatpush1.bf16.msra.mxu0 0
        %608 = vmatprep.subr.bf16.mxu0 0
        %609 = vmatpush1.bf16.msra.mxu0 %v592
        %610 = vmatprep.subr.bf16.mxu0 0
        %611 = vmatpush1.bf16.msra.mxu0 %v591
        %612 = vmatprep.subr.bf16.mxu0 0
        %613 = vmatpush1.bf16.msra.mxu0 %v590
        %614 = vmatprep.subr.bf16.mxu0 0
        %615 = vmatpush1.bf16.msra.mxu0 %v589
        %616 = vmatprep.subr.bf16.mxu0 0
        %617 = vmatpush2.bf16.msra.mxu0 0
        %618 = vmatprep.subr.bf16.mxu0 0
        %619 = vmatpush2.bf16.msra.mxu0 0
        %620 = vmatprep.subr.bf16.mxu0 0
        %621 = vmatpush2.bf16.msra.mxu0 0
        %622 = vmatprep.subr.bf16.mxu0 0
        %623 = vmatpush2.bf16.msra.mxu0 0
        %624 = vmatprep.subr.bf16.mxu0 0
        %625 = vmatpush2.bf16.msra.mxu0 0
        %626 = vmatprep.subr.bf16.mxu0 0
        %627 = vmatpush2.bf16.msra.mxu0 0
        %628 = vmatprep.subr.bf16.mxu0 0
        %629 = vmatpush2.bf16.msra.mxu0 0
        %630 = vmatprep.subr.bf16.mxu0 0
        %631 = vmatpush2.bf16.msra.mxu0 0
        %632 = vmatprep.mubr.bf16.mxu0 0
        %633 = vmatmul.mubr.bf16.gmra.mxu0 %v598
        %v634 = vpop.f32.mrf.mxu0
        %v635 = vadd.f32 %v571, %v634
        %v636 = vpop.f32.mrf.mxu0
        %v637 = vpop.f32.mrf.mxu0
        %v638 = vpop.f32.mrf.mxu0
        %639 = vdwg.mxu0
        %640 = vst [vmem:[%s351] sm:$0xff] %v635
        %s641 = sand.u32 %s231, 1
        %s642 = scalar_lea.sflag [#allocation4], %s641
        %s643 = sand.u32 %s231, 1
        %s644 = smul.addr %s643, 8
        %s645 = scalar_lea.vmem [#allocation5], %s644
        // Predicated region
        $region61: #{tpu_custom_call.1} parent=55 // pred_check
          %p646 = pneg %p241
        $region62: #{tpu_custom_call.1} parent=55 // pred_check_branch
          %648 = sbr.rel (%p646) target = $region64
        $region63: #{tpu_custom_call.1} parent=55 // pred_region
          %s650 = ssub.s32 128, 128
          %651 = vsyncadd %s642, %s650
          %s652 = smul.addr %s24, 128
          %s653 = scalar_lea.hbm %s9, %s652
          %s655 = sshll.u32 %s645, 4
          %s656 = int_to_ptr.vmem [resolvable:$true] %s655
          %658 = dma.vmem_to_hbm [thread:$0]  %s656, 128, %s653, %s642
        $region64: #{tpu_custom_call.1} parent=55 // pred_fallthru
          _
      $region56: #{tpu_custom_call.1} parent=5 // pred_fallthru
        _
      %p659 = scmp.le.s32.totalorder 2, %s19
      // Predicated region
      $region65: #{tpu_custom_call.1} parent=5 // pred_check
        %p660 = pneg %p659
      $region66: #{tpu_custom_call.1} parent=5 // pred_check_branch
        %662 = sbr.rel (%p660) target = $region68
      $region67: #{tpu_custom_call.1} parent=5 // pred_region
        %s663 = ssub.s32 %s19, 2
        // Predicated region
        $region69: #{tpu_custom_call.1} parent=67 // pred_check
          %p664 = pneg %p247
        $region70: #{tpu_custom_call.1} parent=67 // pred_check_branch
          %666 = sbr.rel (%p664) target = $region72
        $region71: #{tpu_custom_call.1} parent=67 // pred_region
          %s667 = sand.u32 %s232, 1
          %s668 = scalar_lea.sflag [#allocation4], %s667
          %s669 = sand.u32 %s232, 1
          %s670 = smul.addr %s669, 8
          %s671 = scalar_lea.vmem [#allocation5], %s670
          %672 = dma.done %s668, 128
        $region72: #{tpu_custom_call.1} parent=67 // pred_fallthru
          _
      $region68: #{tpu_custom_call.1} parent=5 // pred_fallthru
        _
    $region6: #{tpu_custom_call.1} parent=1 // loop_footer
      %s23 = sadd.s32 1, %s19
    $region7: #{tpu_custom_call.1} parent=1 // loop_footer_branch
      %18 = sbr.rel target = $region3
    $region8: #{tpu_custom_call.1} parent=1 // loop_exit
      _
    %673 = vsyncpa [#allocation3], 1
    %s674 = scalar_lea.sflag [#allocation3], 1
    %675 = vsyncpa %s674, 1
    %676 = vsyncpa [#allocation4], 1
    %s677 = scalar_lea.sflag [#allocation4], 1
    %678 = vsyncpa %s677, 1

// kernel: tpu_custom_call.1
$region0: #{tpu_custom_call.1}
  #allocation0 [shape = 'u32[]', space=smem, size = 0x4, offset = 0x4, fixed_abs, tag = 'smem constant byte address 0x4 - core index']
  #allocation1 [shape = 'u32[144,128]{1,0:T(1,128)}', space=vmem, size = 0x12000, scoped, tag = 'internal scratch']
  %s0 = inlined_call_operand.vmem [shape: f32[16,8], index: 0, kind: input, shape index: {}]
  %s1 = inlined_call_operand.vmem [shape: f32[16,4], index: 1, kind: input, shape index: {}]
  %s2 = inlined_call_operand.vmem [shape: bf16[8,64], index: 2, kind: input, shape index: {}]
  %s3 = inlined_call_operand.vmem [shape: bf16[4,64], index: 3, kind: input, shape index: {}]
  %s4 = inlined_call_operand.vmem [shape: f32[1,64], index: 4, kind: input, shape index: {}]
  %s5 = inlined_call_operand.vmem [shape: bf16[64,64], index: 5, kind: input, shape index: {}]
  %s6 = inlined_call_operand.vmem [shape: f32[1,64], index: 6, kind: input, shape index: {}]
  %s7 = inlined_call_operand.hbm [shape: bf16[64,128], index: 7, kind: input, shape index: {}]
  %s8 = inlined_call_operand.vmem [shape: f32[1,128], index: 8, kind: input, shape index: {}]
  %s9 = inlined_call_operand.hbm [shape: f32[16,128], index: 9, kind: output, shape index: {}]
  %s10 = sld [smem:[#allocation0]]
  $region73: #{tpu_custom_call.1} parent=0
    _
  %s12 = ssub.s32 1, %s10
  %s13 = scalar_select 0, %s12, %s10
  $region1: #{tpu_custom_call.1} parent=0
    #allocation2 [shape = 'u8[16384]{0}', space=vmem, size = 0x4000, scoped, tag = 'input window, operand 7, single buffered']
    #allocation3 [shape = 's32[2]{0}', space=sflag, size = 0x8, scoped, tag = 'scoped memory for tpu_custom_call.1']
    #allocation4 [shape = 's32[2]{0}', space=sflag, size = 0x8, scoped, tag = 'scoped memory for tpu_custom_call.1']
    #allocation5 [shape = 'u8[8192]{0}', space=vmem, size = 0x2000, scoped, tag = 'output window, operand 0']
    %14 = vsyncpa [#allocation3], 0
    %15 = vsyncpa [#allocation4], 0
    %s16 = scalar_lea.sflag [#allocation4], 1
    %17 = vsyncpa %s16, 0
    loop: start=0, step=1, limit=4
    $region2: #{tpu_custom_call.1} parent=1 // loop_pre_header
      _
    $region3: #{tpu_custom_call.1} parent=1 // loop_header
      %s19 = sphi 0, %s23
      %p20 = scmp.ge.s32.totalorder %s19, 4
      %s29 = sphi 0, %s31
      %s32 = sphi 0, %s29
      %s33 = sphi 0, %s32
      %s49 = sphi 0, %s33
      %s55 = sphi 0, %s57
      %s58 = sphi 0, %s55
      %s59 = sphi 0, %s58
      %s75 = sphi 0, %s59
      %s79 = sphi 0, %s79
      %s81 = sphi 0, %s79
      %s82 = sphi 0, %s81
      %s96 = sphi 0, %s82
      %s100 = sphi 0, %s100
      %s102 = sphi 0, %s100
      %s103 = sphi 0, %s102
      %s117 = sphi 0, %s103
      %s121 = sphi 0, %s121
      %s123 = sphi 0, %s121
      %s124 = sphi 0, %s123
      %s138 = sphi 0, %s124
      %s142 = sphi 0, %s142
      %s144 = sphi 0, %s142
      %s145 = sphi 0, %s144
      %s159 = sphi 0, %s145
      %s163 = sphi 0, %s163
      %s165 = sphi 0, %s163
      %s166 = sphi 0, %s165
      %s180 = sphi 0, %s166
      %s184 = sphi 0, %s184
      %s186 = sphi 0, %s184
      %s187 = sphi 0, %s186
      %s201 = sphi 0, %s187
      %s205 = sphi 0, %s205
      %s207 = sphi 0, %s205
      %s208 = sphi 0, %s207
      %s222 = sphi 0, %s208
      %s228 = sphi 0, %s230
      %s231 = sphi 0, %s228
      %s232 = sphi 0, %s231
      %s248 = sphi 0, %s232
    $region4: #{tpu_custom_call.1} parent=1 // loop_header_branch
      %22 = sbr.rel (%p20) target = $region8
    $region5: #{tpu_custom_call.1} parent=1 // loop_body
      %s24 = ssub.s32 %s19, 1
      %s25 = ssub.s32 %s19, 2
      %s26 = sadd.s32 %s19, 1
      %s27 = ssub.s32 %s19, %s26
      %p28 = scmp.eq.s32.totalorder %s27, 0
      %s30 = sadd.s32 %s29, 1
      %s31 = scalar_select %p28, %s29, %s30
      %p34 = pneg %p28
      %p35 = scmp.eq.s32.totalorder %s19, 1
      %p36 = por %p34, %p35
      %p37 = scmp.ne.s32.totalorder %s29, %s32
      %p38 = scmp.eq.s32.totalorder %s19, 0
      %p39 = por %p37, %p38
      %p40 = scmp.ne.s32.totalorder %s29, %s32
      %p41 = scmp.eq.s32.totalorder %s24, 1
      %p42 = por %p40, %p41
      %p43 = scmp.ne.s32.totalorder %s32, %s33
      %p44 = scmp.eq.s32.totalorder %s24, 0
      %p45 = por %p43, %p44
      %p46 = scmp.ne.s32.totalorder %s32, %s33
      %p47 = scmp.eq.s32.totalorder %s25, 1
      %p48 = por %p46, %p47
      %p50 = scmp.ne.s32.totalorder %s33, %s49
      %p51 = scmp.eq.s32.totalorder %s25, 0
      %p52 = por %p50, %p51
      %s53 = ssub.s32 %s19, %s26
      %p54 = scmp.eq.s32.totalorder %s53, 0
      %s56 = sadd.s32 %s55, 1
      %s57 = scalar_select %p54, %s55, %s56
      %p60 = pneg %p54
      %p61 = scmp.eq.s32.totalorder %s19, 1
      %p62 = por %p60, %p61
      %p63 = scmp.ne.s32.totalorder %s55, %s58
      %p64 = scmp.eq.s32.totalorder %s19, 0
      %p65 = por %p63, %p64
      %p66 = scmp.ne.s32.totalorder %s55, %s58
      %p67 = scmp.eq.s32.totalorder %s24, 1
      %p68 = por %p66, %p67
      %p69 = scmp.ne.s32.totalorder %s58, %s59
      %p70 = scmp.eq.s32.totalorder %s24, 0
      %p71 = por %p69, %p70
      %p72 = scmp.ne.s32.totalorder %s58, %s59
      %p73 = scmp.eq.s32.totalorder %s25, 1
      %p74 = por %p72, %p73
      %p76 = scmp.ne.s32.totalorder %s59, %s75
      %p77 = scmp.eq.s32.totalorder %s25, 0
      %p78 = por %p76, %p77
      %s80 = sadd.s32 %s79, 1
      %p83 = scmp.eq.s32.totalorder %s19, 1
      %p84 = scmp.ne.s32.totalorder %s79, %s81
      %p85 = scmp.eq.s32.totalorder %s19, 0
      %p86 = por %p84, %p85
      %p87 = scmp.ne.s32.totalorder %s79, %s81
      %p88 = scmp.eq.s32.totalorder %s24, 1
      %p89 = por %p87, %p88
      %p90 = scmp.ne.s32.totalorder %s81, %s82
      %p91 = scmp.eq.s32.totalorder %s24, 0
      %p92 = por %p90, %p91
      %p93 = scmp.ne.s32.totalorder %s81, %s82
      %p94 = scmp.eq.s32.totalorder %s25, 1
      %p95 = por %p93, %p94
      %p97 = scmp.ne.s32.totalorder %s82, %s96
      %p98 = scmp.eq.s32.totalorder %s25, 0
      %p99 = por %p97, %p98
      %s101 = sadd.s32 %s100, 1
      %p104 = scmp.eq.s32.totalorder %s19, 1
      %p105 = scmp.ne.s32.totalorder %s100, %s102
      %p106 = scmp.eq.s32.totalorder %s19, 0
      %p107 = por %p105, %p106
      %p108 = scmp.ne.s32.totalorder %s100, %s102
      %p109 = scmp.eq.s32.totalorder %s24, 1
      %p110 = por %p108, %p109
      %p111 = scmp.ne.s32.totalorder %s102, %s103
      %p112 = scmp.eq.s32.totalorder %s24, 0
      %p113 = por %p111, %p112
      %p114 = scmp.ne.s32.totalorder %s102, %s103
      %p115 = scmp.eq.s32.totalorder %s25, 1
      %p116 = por %p114, %p115
      %p118 = scmp.ne.s32.totalorder %s103, %s117
      %p119 = scmp.eq.s32.totalorder %s25, 0
      %p120 = por %p118, %p119
      %s122 = sadd.s32 %s121, 1
      %p125 = scmp.eq.s32.totalorder %s19, 1
      %p126 = scmp.ne.s32.totalorder %s121, %s123
      %p127 = scmp.eq.s32.totalorder %s19, 0
      %p128 = por %p126, %p127
      %p129 = scmp.ne.s32.totalorder %s121, %s123
      %p130 = scmp.eq.s32.totalorder %s24, 1
      %p131 = por %p129, %p130
      %p132 = scmp.ne.s32.totalorder %s123, %s124
      %p133 = scmp.eq.s32.totalorder %s24, 0
      %p134 = por %p132, %p133
      %p135 = scmp.ne.s32.totalorder %s123, %s124
      %p136 = scmp.eq.s32.totalorder %s25, 1
      %p137 = por %p135, %p136
      %p139 = scmp.ne.s32.totalorder %s124, %s138
      %p140 = scmp.eq.s32.totalorder %s25, 0
      %p141 = por %p139, %p140
      %s143 = sadd.s32 %s142, 1
      %p146 = scmp.eq.s32.totalorder %s19, 1
      %p147 = scmp.ne.s32.totalorder %s142, %s144
      %p148 = scmp.eq.s32.totalorder %s19, 0
      %p149 = por %p147, %p148
      %p150 = scmp.ne.s32.totalorder %s142, %s144
      %p151 = scmp.eq.s32.totalorder %s24, 1
      %p152 = por %p150, %p151
      %p153 = scmp.ne.s32.totalorder %s144, %s145
      %p154 = scmp.eq.s32.totalorder %s24, 0
      %p155 = por %p153, %p154
      %p156 = scmp.ne.s32.totalorder %s144, %s145
      %p157 = scmp.eq.s32.totalorder %s25, 1
      %p158 = por %p156, %p157
      %p160 = scmp.ne.s32.totalorder %s145, %s159
      %p161 = scmp.eq.s32.totalorder %s25, 0
      %p162 = por %p160, %p161
      %s164 = sadd.s32 %s163, 1
      %p167 = scmp.eq.s32.totalorder %s19, 1
      %p168 = scmp.ne.s32.totalorder %s163, %s165
      %p169 = scmp.eq.s32.totalorder %s19, 0
      %p170 = por %p168, %p169
      %p171 = scmp.ne.s32.totalorder %s163, %s165
      %p172 = scmp.eq.s32.totalorder %s24, 1
      %p173 = por %p171, %p172
      %p174 = scmp.ne.s32.totalorder %s165, %s166
      %p175 = scmp.eq.s32.totalorder %s24, 0
      %p176 = por %p174, %p175
      %p177 = scmp.ne.s32.totalorder %s165, %s166
      %p178 = scmp.eq.s32.totalorder %s25, 1
      %p179 = por %p177, %p178
      %p181 = scmp.ne.s32.totalorder %s166, %s180
      %p182 = scmp.eq.s32.totalorder %s25, 0
      %p183 = por %p181, %p182
      %s185 = sadd.s32 %s184, 1
      %p188 = scmp.eq.s32.totalorder %s19, 1
      %p189 = scmp.ne.s32.totalorder %s184, %s186
      %p190 = scmp.eq.s32.totalorder %s19, 0
      %p191 = por %p189, %p190
      %p192 = scmp.ne.s32.totalorder %s184, %s186
      %p193 = scmp.eq.s32.totalorder %s24, 1
      %p194 = por %p192, %p193
      %p195 = scmp.ne.s32.totalorder %s186, %s187
      %p196 = scmp.eq.s32.totalorder %s24, 0
      %p197 = por %p195, %p196
      %p198 = scmp.ne.s32.totalorder %s186, %s187
      %p199 = scmp.eq.s32.totalorder %s25, 1
      %p200 = por %p198, %p199
      %p202 = scmp.ne.s32.totalorder %s187, %s201
      %p203 = scmp.eq.s32.totalorder %s25, 0
      %p204 = por %p202, %p203
      %s206 = sadd.s32 %s205, 1
      %p209 = scmp.eq.s32.totalorder %s19, 1
      %p210 = scmp.ne.s32.totalorder %s205, %s207
      %p211 = scmp.eq.s32.totalorder %s19, 0
      %p212 = por %p210, %p211
      %p213 = scmp.ne.s32.totalorder %s205, %s207
      %p214 = scmp.eq.s32.totalorder %s24, 1
      %p215 = por %p213, %p214
      %p216 = scmp.ne.s32.totalorder %s207, %s208
      %p217 = scmp.eq.s32.totalorder %s24, 0
      %p218 = por %p216, %p217
      %p219 = scmp.ne.s32.totalorder %s207, %s208
      %p220 = scmp.eq.s32.totalorder %s25, 1
      %p221 = por %p219, %p220
      %p223 = scmp.ne.s32.totalorder %s208, %s222
      %p224 = scmp.eq.s32.totalorder %s25, 0
      %p225 = por %p223, %p224
      %s226 = ssub.s32 %s19, %s26
      %p227 = scmp.eq.s32.totalorder %s226, 0
      %s229 = sadd.s32 %s228, 1
      %s230 = scalar_select %p227, %s228, %s229
      %p233 = pneg %p227
      %p234 = scmp.eq.s32.totalorder %s19, 1
      %p235 = por %p233, %p234
      %p236 = scmp.ne.s32.totalorder %s228, %s231
      %p237 = scmp.eq.s32.totalorder %s19, 0
      %p238 = por %p236, %p237
      %p239 = scmp.ne.s32.totalorder %s228, %s231
      %p240 = scmp.eq.s32.totalorder %s24, 1
      %p241 = por %p239, %p240
      %p242 = scmp.ne.s32.totalorder %s231, %s232
      %p243 = scmp.eq.s32.totalorder %s24, 0
      %p244 = por %p242, %p243
      %p245 = scmp.ne.s32.totalorder %s231, %s232
      %p246 = scmp.eq.s32.totalorder %s25, 1
      %p247 = por %p245, %p246
      %p249 = scmp.ne.s32.totalorder %s232, %s248
      %p250 = scmp.eq.s32.totalorder %s25, 0
      %p251 = por %p249, %p250
      %p252 = scmp.le.s32.totalorder 1, %s19
      %p253 = scmp.lt.s32.totalorder %s19, 3
      %p254 = pnand %p252, %p253
      %p255 = pneg %p254
      // Predicated region
      $region9: #{tpu_custom_call.1} parent=5 // pred_check
        _
      $region10: #{tpu_custom_call.1} parent=5 // pred_check_branch
        %257 = sbr.rel (%p254) target = $region12
      $region11: #{tpu_custom_call.1} parent=5 // pred_region
        %s258 = ssub.s32 %s19, 1
        // Predicated region
        $region13: #{tpu_custom_call.1} parent=11 // pred_check
          %p259 = pneg %p92
        $region14: #{tpu_custom_call.1} parent=11 // pred_check_branch
          %261 = sbr.rel (%p259) target = $region16
        $region15: #{tpu_custom_call.1} parent=11 // pred_region
          _
        $region16: #{tpu_custom_call.1} parent=11 // pred_fallthru
          _
        // Predicated region
        $region17: #{tpu_custom_call.1} parent=11 // pred_check
          %p262 = pneg %p113
        $region18: #{tpu_custom_call.1} parent=11 // pred_check_branch
          %264 = sbr.rel (%p262) target = $region20
        $region19: #{tpu_custom_call.1} parent=11 // pred_region
          _
        $region20: #{tpu_custom_call.1} parent=11 // pred_fallthru
          _
        // Predicated region
        $region21: #{tpu_custom_call.1} parent=11 // pred_check
          %p265 = pneg %p134
        $region22: #{tpu_custom_call.1} parent=11 // pred_check_branch
          %267 = sbr.rel (%p265) target = $region24
        $region23: #{tpu_custom_call.1} parent=11 // pred_region
          _
        $region24: #{tpu_custom_call.1} parent=11 // pred_fallthru
          _
        // Predicated region
        $region25: #{tpu_custom_call.1} parent=11 // pred_check
          %p268 = pneg %p155
        $region26: #{tpu_custom_call.1} parent=11 // pred_check_branch
          %270 = sbr.rel (%p268) target = $region28
        $region27: #{tpu_custom_call.1} parent=11 // pred_region
          _
        $region28: #{tpu_custom_call.1} parent=11 // pred_fallthru
          _
        // Predicated region
        $region29: #{tpu_custom_call.1} parent=11 // pred_check
          %p271 = pneg %p176
        $region30: #{tpu_custom_call.1} parent=11 // pred_check_branch
          %273 = sbr.rel (%p271) target = $region32
        $region31: #{tpu_custom_call.1} parent=11 // pred_region
          _
        $region32: #{tpu_custom_call.1} parent=11 // pred_fallthru
          _
        // Predicated region
        $region33: #{tpu_custom_call.1} parent=11 // pred_check
          %p274 = pneg %p197
        $region34: #{tpu_custom_call.1} parent=11 // pred_check_branch
          %276 = sbr.rel (%p274) target = $region36
        $region35: #{tpu_custom_call.1} parent=11 // pred_region
          %s278 = ssub.s32 512, 512
          %279 = vsyncadd [#allocation3], %s278
          %s280 = sshll.u32 [#allocation2], 4
          %s281 = int_to_ptr.vmem [resolvable:$true] %s280
          %286 = dma.hbm_to_vmem [thread:$0]  %s7, 512, %s281, [#allocation3], 64, 64, 4
        $region36: #{tpu_custom_call.1} parent=11 // pred_fallthru
          _
        // Predicated region
        $region37: #{tpu_custom_call.1} parent=11 // pred_check
          %p287 = pneg %p218
        $region38: #{tpu_custom_call.1} parent=11 // pred_check_branch
          %289 = sbr.rel (%p287) target = $region40
        $region39: #{tpu_custom_call.1} parent=11 // pred_region
          _
        $region40: #{tpu_custom_call.1} parent=11 // pred_fallthru
          _
      $region12: #{tpu_custom_call.1} parent=5 // pred_fallthru
        _
      %p290 = scmp.lt.s32.totalorder %s19, 2
      // Predicated region
      $region41: #{tpu_custom_call.1} parent=5 // pred_check
        %p291 = pneg %p290
      $region42: #{tpu_custom_call.1} parent=5 // pred_check_branch
        %293 = sbr.rel (%p291) target = $region44
      $region43: #{tpu_custom_call.1} parent=5 // pred_region
        // Predicated region
        $region45: #{tpu_custom_call.1} parent=43 // pred_check
          %p294 = pneg %p39
        $region46: #{tpu_custom_call.1} parent=43 // pred_check_branch
          %296 = sbr.rel (%p294) target = $region48
        $region47: #{tpu_custom_call.1} parent=43 // pred_region
          %p297 = scmp.lt.s32.totalorder %s19, 1
          %s298 = scalar_select %p297, %s19, 1
          %s299 = smul.addr %s298, 8
          %s300 = scalar_lea.vmem %s0, %s299
        $region48: #{tpu_custom_call.1} parent=43 // pred_fallthru
          _
        // Predicated region
        $region49: #{tpu_custom_call.1} parent=43 // pred_check
          %p301 = pneg %p65
        $region50: #{tpu_custom_call.1} parent=43 // pred_check_branch
          %303 = sbr.rel (%p301) target = $region52
        $region51: #{tpu_custom_call.1} parent=43 // pred_region
          %p304 = scmp.lt.s32.totalorder %s19, 1
          %s305 = scalar_select %p304, %s19, 1
          %s306 = smul.addr %s305, 8
          %s307 = scalar_lea.vmem %s1, %s306
        $region52: #{tpu_custom_call.1} parent=43 // pred_fallthru
          _
      $region44: #{tpu_custom_call.1} parent=5 // pred_fallthru
        _
      %p308 = scmp.le.s32.totalorder 1, %s19
      %p309 = scmp.lt.s32.totalorder %s19, 3
      %p310 = pnand %p308, %p309
      %p311 = pneg %p310
      // Predicated region
      $region53: #{tpu_custom_call.1} parent=5 // pred_check
        _
      $region54: #{tpu_custom_call.1} parent=5 // pred_check_branch
        %313 = sbr.rel (%p310) target = $region56
      $region55: #{tpu_custom_call.1} parent=5 // pred_region
        %s314 = ssub.s32 %s19, 1
        // Predicated region
        $region57: #{tpu_custom_call.1} parent=55 // pred_check
          %p315 = pneg %p197
        $region58: #{tpu_custom_call.1} parent=55 // pred_check_branch
          %317 = sbr.rel (%p315) target = $region60
        $region59: #{tpu_custom_call.1} parent=55 // pred_region
          %318 = dma.done [#allocation3], 512
        $region60: #{tpu_custom_call.1} parent=55 // pred_fallthru
          _
        %p319 = scmp.lt.s32.totalorder %s24, 1
        %s320 = scalar_select %p319, %s24, 1
        %s321 = smul.addr %s320, 8
        %s322 = scalar_lea.vmem %s0, %s321
        %p323 = pneg %p45
        %p324 = pneg %p42
        %p325 = scmp.lt.s32.totalorder %s24, 1
        %s326 = scalar_select %p325, %s24, 1
        %s327 = smul.addr %s326, 8
        %s328 = scalar_lea.vmem %s1, %s327
        %p329 = pneg %p71
        %p330 = pneg %p68
        %p331 = pneg %p92
        %p332 = pneg %p89
        %p333 = pneg %p113
        %p334 = pneg %p110
        %p335 = pneg %p134
        %p336 = pneg %p131
        %p337 = pneg %p155
        %p338 = pneg %p152
        %p339 = pneg %p176
        %p340 = pneg %p173
        %p341 = pneg %p197
        %p342 = pneg %p194
        %p343 = pneg %p218
        %p344 = pneg %p215
        %p345 = pneg %p244
        %p346 = pneg %p241
        %s347 = sand.u32 %s231, 1
        %s348 = scalar_lea.sflag [#allocation4], %s347
        %s349 = sand.u32 %s231, 1
        %s350 = smul.addr %s349, 8
        %s351 = scalar_lea.vmem [#allocation5], %s350
        %p352 = scmp.lt.s32.totalorder %s24, 1
        %s353 = scalar_select %p352, %s24, 1
        %s354 = smul.addr %s353, 8
        %s355 = scalar_lea.vmem %s0, %s354
        %p356 = scmp.lt.s32.totalorder %s24, 1
        %s357 = scalar_select %p356, %s24, 1
        %s358 = smul.addr %s357, 8
        %s359 = scalar_lea.vmem %s1, %s358
        %v361 = vld [vmem:[%s355] sm:$0xff]
        %v362 = vpack.c.bf16 %v361, %v361
        %v363 = vld [vmem:[%s2] sm:$0xf]
        %v364 = vld [vmem:[%s359] sm:$0xff]
        %v365 = vpack.c.bf16 %v364, %v364
        %v366 = vld [vmem:[%s3] sm:$0x3]
        %vm367 = vcmask 31744
        %v369 = vsel %vm367, %v365, 0
        %vm371 = vcmask 1041408
        %v373 = vsel %vm371, %v366, 0
        %375 = vmatprep.subr.bf16.mxu0 0
        %376 = vmatpush1.bf16.msra.mxu0 0
        %377 = vmatprep.subr.bf16.mxu0 0
        %378 = vmatpush1.bf16.msra.mxu0 0
        %379 = vmatprep.subr.bf16.mxu0 0
        %380 = vmatpush1.bf16.msra.mxu0 0
        %381 = vmatprep.subr.bf16.mxu0 0
        %382 = vmatpush1.bf16.msra.mxu0 0
        %383 = vmatprep.subr.bf16.mxu0 0
        %384 = vmatpush1.bf16.msra.mxu0 0
        %385 = vmatprep.subr.bf16.mxu0 0
        %386 = vmatpush1.bf16.msra.mxu0 0
        %387 = vmatprep.subr.bf16.mxu0 0
        %388 = vmatpush1.bf16.msra.mxu0 0
        %389 = vmatprep.subr.bf16.mxu0 0
        %390 = vmatpush1.bf16.msra.mxu0 %v373
        %391 = vmatprep.subr.bf16.mxu0 0
        %392 = vmatpush2.bf16.msra.mxu0 0
        %393 = vmatprep.subr.bf16.mxu0 0
        %394 = vmatpush2.bf16.msra.mxu0 0
        %395 = vmatprep.subr.bf16.mxu0 0
        %396 = vmatpush2.bf16.msra.mxu0 0
        %397 = vmatprep.subr.bf16.mxu0 0
        %398 = vmatpush2.bf16.msra.mxu0 0
        %399 = vmatprep.subr.bf16.mxu0 0
        %400 = vmatpush2.bf16.msra.mxu0 0
        %401 = vmatprep.subr.bf16.mxu0 0
        %402 = vmatpush2.bf16.msra.mxu0 0
        %403 = vmatprep.subr.bf16.mxu0 0
        %404 = vmatpush2.bf16.msra.mxu0 0
        %405 = vmatprep.subr.bf16.mxu0 0
        %406 = vmatpush2.bf16.msra.mxu0 0
        %407 = vmatprep.mubr.bf16.mxu0 0
        %408 = vmatmul.mubr.bf16.gmra.mxu0 %v369
        %v409 = vpop.f32.mrf.mxu0
        %v410 = vadd.f32 0.0, %v409
        %v411 = vpop.f32.mrf.mxu0
        %v412 = vpop.f32.mrf.mxu0
        %v413 = vpop.f32.mrf.mxu0
        %414 = vdwg.mxu0
        %vm415 = vcmask 64512
        %v417 = vsel %vm415, %v362, 0
        %vm419 = vcmask 1043456
        %v421 = vsel %vm419, %v363, 0
        %423 = vmatprep.subr.bf16.mxu0 0
        %424 = vmatpush1.bf16.msra.mxu0 0
        %425 = vmatprep.subr.bf16.mxu0 0
        %426 = vmatpush1.bf16.msra.mxu0 0
        %427 = vmatprep.subr.bf16.mxu0 0
        %428 = vmatpush1.bf16.msra.mxu0 0
        %429 = vmatprep.subr.bf16.mxu0 0
        %430 = vmatpush1.bf16.msra.mxu0 0
        %431 = vmatprep.subr.bf16.mxu0 0
        %432 = vmatpush1.bf16.msra.mxu0 0
        %433 = vmatprep.subr.bf16.mxu0 0
        %434 = vmatpush1.bf16.msra.mxu0 0
        %435 = vmatprep.subr.bf16.mxu0 0
        %436 = vmatpush1.bf16.msra.mxu0 0
        %437 = vmatprep.subr.bf16.mxu0 0
        %438 = vmatpush1.bf16.msra.mxu0 %v421
        %439 = vmatprep.subr.bf16.mxu0 0
        %440 = vmatpush2.bf16.msra.mxu0 0
        %441 = vmatprep.subr.bf16.mxu0 0
        %442 = vmatpush2.bf16.msra.mxu0 0
        %443 = vmatprep.subr.bf16.mxu0 0
        %444 = vmatpush2.bf16.msra.mxu0 0
        %445 = vmatprep.subr.bf16.mxu0 0
        %446 = vmatpush2.bf16.msra.mxu0 0
        %447 = vmatprep.subr.bf16.mxu0 0
        %448 = vmatpush2.bf16.msra.mxu0 0
        %449 = vmatprep.subr.bf16.mxu0 0
        %450 = vmatpush2.bf16.msra.mxu0 0
        %451 = vmatprep.subr.bf16.mxu0 0
        %452 = vmatpush2.bf16.msra.mxu0 0
        %453 = vmatprep.subr.bf16.mxu0 0
        %454 = vmatpush2.bf16.msra.mxu0 0
        %455 = vmatprep.mubr.bf16.mxu0 0
        %456 = vmatmul.mubr.bf16.gmra.mxu0 %v417
        %v457 = vpop.f32.mrf.mxu0
        %v458 = vadd.f32 %v410, %v457
        %v459 = vpop.f32.mrf.mxu0
        %v460 = vpop.f32.mrf.mxu0
        %v461 = vpop.f32.mrf.mxu0
        %462 = vdwg.mxu0
        %v463 = vld [vmem:[%s4] sm:$0x1]
        %v465 = vlaneseq
        %v466 = vshrl.u32 %v465, 7
        %v467 = vsub.s32 0, %v466
        %v468 = vrot.slane %v463, %v467
        %v470 = vadd.f32 %v458, %v468
        %v471 = vmax.f32 %v470, 0.0
        %v472 = vpack.c.bf16 %v471, %v471
        %v473 = vld [vmem:[%s5] sm:$0xf]
        %v474 = vld [vmem:[%s5 + $0x4] sm:$0xf]
        %v475 = vld [vmem:[%s5 + $0x8] sm:$0xf]
        %v476 = vld [vmem:[%s5 + $0xc] sm:$0xf]
        %v477 = vld [vmem:[%s5 + $0x10] sm:$0xf]
        %v478 = vld [vmem:[%s5 + $0x14] sm:$0xf]
        %v479 = vld [vmem:[%s5 + $0x18] sm:$0xf]
        %v480 = vld [vmem:[%s5 + $0x1c] sm:$0xf]
        %v481 = vld [vmem:[%s6] sm:$0x1]
        %v483 = vlaneseq
        %v484 = vshrl.u32 %v483, 7
        %v485 = vsub.s32 0, %v484
        %v486 = vrot.slane %v481, %v485
        %v496 = vunpack.c.l.b16 %v473
        %v497 = vunpack.c.l.b16 %v474
        %v498 = vunpack.c.l.b16 %v475
        %v499 = vunpack.c.l.b16 %v476
        %v500 = vunpack.c.l.b16 %v477
        %v501 = vunpack.c.l.b16 %v478
        %v502 = vunpack.c.l.b16 %v479
        %v503 = vunpack.c.l.b16 %v480
        %v504 = vpack.c.b16 %v497, %v496
        %v505 = vpack.c.b16 %v499, %v498
        %v506 = vpack.c.b16 %v501, %v500
        %v507 = vpack.c.b16 %v503, %v502
        %vm512 = vcmask 523264
        %v514 = vsel %vm512, %v472, 0
        %516 = vmatprep.subr.bf16.mxu0 0
        %517 = vmatpush1.bf16.msra.mxu0 0
        %518 = vmatprep.subr.bf16.mxu0 0
        %519 = vmatpush1.bf16.msra.mxu0 0
        %520 = vmatprep.subr.bf16.mxu0 0
        %521 = vmatpush1.bf16.msra.mxu0 0
        %522 = vmatprep.subr.bf16.mxu0 0
        %523 = vmatpush1.bf16.msra.mxu0 0
        %524 = vmatprep.subr.bf16.mxu0 0
        %525 = vmatpush1.bf16.msra.mxu0 %v507
        %526 = vmatprep.subr.bf16.mxu0 0
        %527 = vmatpush1.bf16.msra.mxu0 %v506
        %528 = vmatprep.subr.bf16.mxu0 0
        %529 = vmatpush1.bf16.msra.mxu0 %v505
        %530 = vmatprep.subr.bf16.mxu0 0
        %531 = vmatpush1.bf16.msra.mxu0 %v504
        %532 = vmatprep.subr.bf16.mxu0 0
        %533 = vmatpush2.bf16.msra.mxu0 0
        %534 = vmatprep.subr.bf16.mxu0 0
        %535 = vmatpush2.bf16.msra.mxu0 0
        %536 = vmatprep.subr.bf16.mxu0 0
        %537 = vmatpush2.bf16.msra.mxu0 0
        %538 = vmatprep.subr.bf16.mxu0 0
        %539 = vmatpush2.bf16.msra.mxu0 0
        %540 = vmatprep.subr.bf16.mxu0 0
        %541 = vmatpush2.bf16.msra.mxu0 0
        %542 = vmatprep.subr.bf16.mxu0 0
        %543 = vmatpush2.bf16.msra.mxu0 0
        %544 = vmatprep.subr.bf16.mxu0 0
        %545 = vmatpush2.bf16.msra.mxu0 0
        %546 = vmatprep.subr.bf16.mxu0 0
        %547 = vmatpush2.bf16.msra.mxu0 0
        %548 = vmatprep.mubr.bf16.mxu0 0
        %549 = vmatmul.mubr.bf16.gmra.mxu0 %v514
        %v550 = vpop.f32.mrf.mxu0
        %v551 = vadd.f32 %v486, %v550
        %v552 = vpop.f32.mrf.mxu0
        %v553 = vpop.f32.mrf.mxu0
        %v554 = vpop.f32.mrf.mxu0
        %555 = vdwg.mxu0
        %v556 = vmax.f32 %v551, 0.0
        %v557 = vpack.c.bf16 %v556, %v556
        %v558 = vld [vmem:[#allocation2] sm:$0xf]
        %v559 = vld [vmem:[#allocation2 + $0x4] sm:$0xf]
        %v560 = vld [vmem:[#allocation2 + $0x8] sm:$0xf]
        %v561 = vld [vmem:[#allocation2 + $0xc] sm:$0xf]
        %v562 = vld [vmem:[#allocation2 + $0x10] sm:$0xf]
        %v563 = vld [vmem:[#allocation2 + $0x14] sm:$0xf]
        %v564 = vld [vmem:[#allocation2 + $0x18] sm:$0xf]
        %v565 = vld [vmem:[#allocation2 + $0x1c] sm:$0xf]
        %v566 = vld [vmem:[%s8] sm:$0x1]
        %v568 = vlaneseq
        %v569 = vshrl.u32 %v568, 7
        %v570 = vsub.s32 0, %v569
        %v571 = vrot.slane %v566, %v570
        %v581 = vunpack.c.l.b16 %v558
        %v582 = vunpack.c.l.b16 %v559
        %v583 = vunpack.c.l.b16 %v560
        %v584 = vunpack.c.l.b16 %v561
        %v585 = vunpack.c.l.b16 %v562
        %v586 = vunpack.c.l.b16 %v563
        %v587 = vunpack.c.l.b16 %v564
        %v588 = vunpack.c.l.b16 %v565
        %v589 = vpack.c.b16 %v582, %v581
        %v590 = vpack.c.b16 %v584, %v583
        %v591 = vpack.c.b16 %v586, %v585
        %v592 = vpack.c.b16 %v588, %v587
        %v598 = vsel %vm512, %v557, 0
        %600 = vmatprep.subr.bf16.mxu0 0
        %601 = vmatpush1.bf16.msra.mxu0 0
        %602 = vmatprep.subr.bf16.mxu0 0
        %603 = vmatpush1.bf16.msra.mxu0 0
        %604 = vmatprep.subr.bf16.mxu0 0
        %605 = vmatpush1.bf16.msra.mxu0 0
        %606 = vmatprep.subr.bf16.mxu0 0
        %607 = vmatpush1.bf16.msra.mxu0 0
        %608 = vmatprep.subr.bf16.mxu0 0
        %609 = vmatpush1.bf16.msra.mxu0 %v592
        %610 = vmatprep.subr.bf16.mxu0 0
        %611 = vmatpush1.bf16.msra.mxu0 %v591
        %612 = vmatprep.subr.bf16.mxu0 0
        %613 = vmatpush1.bf16.msra.mxu0 %v590
        %614 = vmatprep.subr.bf16.mxu0 0
        %615 = vmatpush1.bf16.msra.mxu0 %v589
        %616 = vmatprep.subr.bf16.mxu0 0
        %617 = vmatpush2.bf16.msra.mxu0 0
        %618 = vmatprep.subr.bf16.mxu0 0
        %619 = vmatpush2.bf16.msra.mxu0 0
        %620 = vmatprep.subr.bf16.mxu0 0
        %621 = vmatpush2.bf16.msra.mxu0 0
        %622 = vmatprep.subr.bf16.mxu0 0
        %623 = vmatpush2.bf16.msra.mxu0 0
        %624 = vmatprep.subr.bf16.mxu0 0
        %625 = vmatpush2.bf16.msra.mxu0 0
        %626 = vmatprep.subr.bf16.mxu0 0
        %627 = vmatpush2.bf16.msra.mxu0 0
        %628 = vmatprep.subr.bf16.mxu0 0
        %629 = vmatpush2.bf16.msra.mxu0 0
        %630 = vmatprep.subr.bf16.mxu0 0
        %631 = vmatpush2.bf16.msra.mxu0 0
        %632 = vmatprep.mubr.bf16.mxu0 0
        %633 = vmatmul.mubr.bf16.gmra.mxu0 %v598
        %v634 = vpop.f32.mrf.mxu0
        %v635 = vadd.f32 %v571, %v634
        %v636 = vpop.f32.mrf.mxu0
        %v637 = vpop.f32.mrf.mxu0
        %v638 = vpop.f32.mrf.mxu0
        %639 = vdwg.mxu0
        %640 = vst [vmem:[%s351] sm:$0xff] %v635
        %s641 = sand.u32 %s231, 1
        %s642 = scalar_lea.sflag [#allocation4], %s641
        %s643 = sand.u32 %s231, 1
        %s644 = smul.addr %s643, 8
        %s645 = scalar_lea.vmem [#allocation5], %s644
        // Predicated region
        $region61: #{tpu_custom_call.1} parent=55 // pred_check
          %p646 = pneg %p241
        $region62: #{tpu_custom_call.1} parent=55 // pred_check_branch
          %648 = sbr.rel (%p646) target = $region64
        $region63: #{tpu_custom_call.1} parent=55 // pred_region
          %s650 = ssub.s32 128, 128
          %651 = vsyncadd %s642, %s650
          %s652 = smul.addr %s24, 128
          %s653 = scalar_lea.hbm %s9, %s652
          %s655 = sshll.u32 %s645, 4
          %s656 = int_to_ptr.vmem [resolvable:$true] %s655
          %658 = dma.vmem_to_hbm [thread:$0]  %s656, 128, %s653, %s642
        $region64: #{tpu_custom_call.1} parent=55 // pred_fallthru
          _
      $region56: #{tpu_custom_call.1} parent=5 // pred_fallthru
        _
      %p659 = scmp.le.s32.totalorder 2, %s19
      // Predicated region
      $region65: #{tpu_custom_call.1} parent=5 // pred_check
        %p660 = pneg %p659
      $region66: #{tpu_custom_call.1} parent=5 // pred_check_branch
        %662 = sbr.rel (%p660) target = $region68
      $region67: #{tpu_custom_call.1} parent=5 // pred_region
        %s663 = ssub.s32 %s19, 2
        // Predicated region
        $region69: #{tpu_custom_call.1} parent=67 // pred_check
          %p664 = pneg %p247
        $region70: #{tpu_custom_call.1} parent=67 // pred_check_branch
          %666 = sbr.rel (%p664) target = $region72
        $region71: #{tpu_custom_call.1} parent=67 // pred_region
          %s667 = sand.u32 %s232, 1
          %s668 = scalar_lea.sflag [#allocation4], %s667
          %s669 = sand.u32 %s232, 1
          %s670 = smul.addr %s669, 8
          %s671 = scalar_lea.vmem [#allocation5], %s670
          %672 = dma.done %s668, 128
        $region72: #{tpu_custom_call.1} parent=67 // pred_fallthru
          _
      $region68: #{tpu_custom_call.1} parent=5 // pred_fallthru
        _
    $region6: #{tpu_custom_call.1} parent=1 // loop_footer
      %s23 = sadd.s32 1, %s19
    $region7: #{tpu_custom_call.1} parent=1 // loop_footer_branch
      %18 = sbr.rel target = $region3
    $region8: #{tpu_custom_call.1} parent=1 // loop_exit
      _
    %673 = vsyncpa [#allocation3], 1
    %s674 = scalar_lea.sflag [#allocation3], 1
    %675 = vsyncpa %s674, 1
    %676 = vsyncpa [#allocation4], 1
    %s677 = scalar_lea.sflag [#allocation4], 1
    %678 = vsyncpa %s677, 1

</llo_original>
